<compile_context>
chip_gen: v7x
topology: tpu7x:2x2x1
jax: 0.10.0
libtpu: 0.0.40
codegen_flags: <defaults>
</compile_context>

<pallas_src>
import functools

import jax
import jax.numpy as jnp
from jax import lax
from jax.experimental import pallas as pl
from jax.experimental.pallas import tpu as pltpu

_LANE = 128


def _round_up(x, m):
    return (x + m - 1) // m * m


def _pick_row_tile(H, W):
    """Largest divisor of H that keeps ~<=512 matmul rows per tile (cap 8)."""
    target = min(8, max(1, 512 // max(W, 1)))
    th = 1
    for cand in range(1, H + 1):
        if H % cand == 0 and cand <= target:
            th = cand
    return th


def _bnconv_kernel(xpad_ref, w_ref, b_ref, o_ref, *, TH, W, KH, KW, ph, pw,
                   res_connect):
    # xpad_ref: (1, H+KH-1, W+KW-1, Cin_p)  padded image (one batch element)
    # w_ref   : (KH, KW, Cin_p, Cout_p)     bf16 weights (constant over grid)
    # b_ref   : (1, Cout_p)                 f32 bias
    # o_ref   : (1, TH, W, Cout_p)          f32 output row tile
    cin_p = xpad_ref.shape[-1]
    cout_p = w_ref.shape[-1]

    h0 = pl.multiple_of(pl.program_id(1) * TH, TH)
    # One dynamic load of the halo slab needed by this row tile.
    slab = xpad_ref[0, pl.ds(h0, TH + KH - 1), :, :]      # (TH+KH-1, Wp, Cin_p)

    acc = jnp.zeros((TH * W, cout_p), dtype=jnp.float32)
    # 3x3 conv as 9 shifted matmuls with K = Cin_p = 128 each.  The W shift
    # (sublane axis) is sliced once per kw; the kh shift is a cheap major-dim
    # slice of the same slab.
    for kw in range(KW):
        xw = slab[:, kw:kw + W, :]                         # (TH+KH-1, W, Cin_p)
        for kh in range(KH):
            xs = xw[kh:kh + TH].reshape(TH * W, cin_p)     # layout-free (W%8==0)
            acc += jnp.dot(xs, w_ref[kh, kw],
                           preferred_element_type=jnp.float32)

    acc = acc + b_ref[...]                                 # (1, Cout_p) broadcast
    acc = jnp.maximum(acc, 0.0)                            # activation = relu

    if res_connect:
        # Residual = interior of the padded input (same block, no extra DMA).
        res = slab[ph:ph + TH, pw:pw + W, :].reshape(TH * W, cin_p)
        acc = acc + res.astype(jnp.float32)

    o_ref[0] = acc.reshape(TH, W, cout_p).astype(o_ref.dtype)


def bn_conv(x_nchw, weight_hwio, bias, *, res_connect=False):
    """Forward of BnConv. x_nchw: (N, Cin, H, W) f32. Returns (N, Cout, H, W) f32."""
    N, Cin, H, W = x_nchw.shape
    KH, KW, wcin, Cout = weight_hwio.shape
    assert wcin == Cin
    # Matches the nn.Module: res_connect only when channels_in == channels_out.
    res_connect = bool(res_connect) and (Cin == Cout)

    cin_p = _round_up(Cin, _LANE)
    cout_p = _round_up(Cout, _LANE)

    # PyTorch 'same' padding (asymmetric for even kernels: extra on the far side).
    ph_t, ph_b = (KH - 1) // 2, (KH - 1) - (KH - 1) // 2
    pw_l, pw_r = (KW - 1) // 2, (KW - 1) - (KW - 1) // 2

    # NCHW -> NHWC, bf16 operands, lane-dense channel padding, spatial 'same' pad.
    x = jnp.transpose(x_nchw, (0, 2, 3, 1)).astype(jnp.bfloat16)
    x_pad = jnp.pad(x, ((0, 0), (ph_t, ph_b), (pw_l, pw_r), (0, cin_p - Cin)))
    w = jnp.pad(weight_hwio.astype(jnp.bfloat16),
                ((0, 0), (0, 0), (0, cin_p - Cin), (0, cout_p - Cout)))
    b = jnp.pad(bias.astype(jnp.float32), (0, cout_p - Cout)).reshape(1, cout_p)

    Hp, Wp = H + KH - 1, W + KW - 1
    TH = _pick_row_tile(H, W)
    n_ht = H // TH

    kernel = functools.partial(_bnconv_kernel, TH=TH, W=W, KH=KH, KW=KW,
                               ph=ph_t, pw=pw_l, res_connect=res_connect)

    # Explicit VMEM budget: double buffers for padded image + output tile +
    # (grid-invariant) weights/bias, capped at v7x's 64 MiB physical VMEM.
    block_bytes = (Hp * Wp * cin_p * 2 + TH * W * cout_p * 4
                   + KH * KW * cin_p * cout_p * 2 + cout_p * 4)
    vmem_limit = min(64 * 1024 * 1024,
                     max(32 * 1024 * 1024, 4 * block_bytes + (2 << 20)))

    out_nhwc = pl.pallas_call(
        kernel,
        out_shape=jax.ShapeDtypeStruct((N, H, W, cout_p), jnp.float32),
        grid_spec=pltpu.PrefetchScalarGridSpec(
            num_scalar_prefetch=0,
            grid=(N, n_ht),
            in_specs=[
                # Whole padded image; index constant along the h axis, so it
                # is DMA'd once per batch element.
                pl.BlockSpec((1, Hp, Wp, cin_p), lambda n, h: (n, 0, 0, 0)),
                # Grid-invariant weights / bias (constant index => no re-DMA).
                pl.BlockSpec((KH, KW, cin_p, cout_p),
                             lambda n, h: (0, 0, 0, 0)),
                pl.BlockSpec((1, cout_p), lambda n, h: (0, 0)),
            ],
            out_specs=pl.BlockSpec((1, TH, W, cout_p),
                                   lambda n, h: (n, h, 0, 0)),
        ),
        compiler_params=pltpu.CompilerParams(
            dimension_semantics=("parallel", "parallel"),
            vmem_limit_bytes=vmem_limit),
    )(x_pad, w, b)

    # Drop channel padding, NHWC -> NCHW (boundary glue only).
    return jnp.transpose(out_nhwc[..., :Cout], (0, 3, 1, 2))


def _reference(x_nchw, weight_hwio, bias, *, res_connect):
    Cin, Cout = x_nchw.shape[1], weight_hwio.shape[-1]
    res_connect = res_connect and Cin == Cout
    x = jnp.transpose(x_nchw, (0, 2, 3, 1)).astype(jnp.bfloat16)
    wgt = weight_hwio.astype(jnp.bfloat16)
    y = lax.conv_general_dilated(
        x, wgt, window_strides=(1, 1), padding="SAME",
        dimension_numbers=("NHWC", "HWIO", "NHWC"),
        preferred_element_type=jnp.float32)
    y = jnp.maximum(y + bias.reshape(1, 1, 1, -1).astype(jnp.float32), 0.0)
    if res_connect:
        y = y + x.astype(jnp.float32)
    return jnp.transpose(y, (0, 3, 1, 2))


if __name__ == "__main__":
    key = jax.random.PRNGKey(0)
    k_x, k_w, k_b = jax.random.split(key, 3)

    N, Cin, Cout, H, W, K = 2, 4, 4, 16, 16, 3

    x = jax.random.normal(k_x, (N, Cin, H, W), dtype=jnp.float32)
    # Deterministic Conv2d-style init (uniform, fan_in scaled).
    fan_in = Cin * K * K
    bound = 1.0 / (fan_in ** 0.5)
    weight = jax.random.uniform(k_w, (K, K, Cin, Cout), jnp.float32,
                                -bound, bound)
    bias = jax.random.uniform(k_b, (Cout,), jnp.float32, -bound, bound)

    # res_connect=True (Cin == Cout) exercises the full forward path.
    out = bn_conv(x, weight, bias, res_connect=True)
    out = jax.block_until_ready(out)

    ref = _reference(x, weight, bias, res_connect=True)
    assert out.shape == (N, Cout, H, W)
    assert jnp.allclose(out, ref, atol=2e-3, rtol=2e-3), \
        float(jnp.max(jnp.abs(out - ref)))

    print("KERNEL_OK")
</pallas_src>

<mosaic_0001>
module attributes {stable_mosaic.version = 11 : i64} {
  func.func @_bnconv_kernel(%arg0: i32, %arg1: i32, %arg2: memref<1x18x18x128xbf16, #tpu.memory_space<vmem>>, %arg3: memref<3x3x128x128xbf16, #tpu.memory_space<vmem>>, %arg4: memref<1x128xf32, #tpu.memory_space<vmem>>, %arg5: memref<1x8x16x128xf32, #tpu.memory_space<vmem>>) attributes {dimension_semantics = [#tpu.dimension_semantics<parallel>, #tpu.dimension_semantics<parallel>], iteration_bounds = array<i64: 2, 2>, scalar_prefetch = 0 : i64, scratch_operands = 0 : i64, tpu.core_type = #tpu.core_type<tc>, window_params = [{transform_indices = @transform_0, window_bounds = array<i64: 1, 18, 18, 128>}, {pipeline_mode = #tpu.pipeline_mode<synchronous>, transform_indices = @transform_1, window_bounds = array<i64: 3, 3, 128, 128>}, {pipeline_mode = #tpu.pipeline_mode<synchronous>, transform_indices = @transform_2, window_bounds = array<i64: 1, 128>}, {transform_indices = @transform_3, window_bounds = array<i64: 1, 8, 16, 128>}]} {
    %c8_i32 = arith.constant 8 : i32
    %0 = arith.muli %arg1, %c8_i32 : i32
    %1 = tpu.assume_multiple %0, 8 : i32
    %c0 = arith.constant 0 : index
    %2 = arith.index_cast %1 : i32 to index
    %c0_0 = arith.constant 0 : index
    %c0_1 = arith.constant 0 : index
    %3 = vector.load %arg2[%c0, %2, %c0_0, %c0_1] : memref<1x18x18x128xbf16, #tpu.memory_space<vmem>>, vector<1x10x18x128xbf16>
    %4 = vector.shape_cast %3 : vector<1x10x18x128xbf16> to vector<10x18x128xbf16>
    %cst = arith.constant 0.000000e+00 : f32
    %5 = vector.broadcast %cst : f32 to vector<128x128xf32>
    %6 = vector.extract_strided_slice %4 {offsets = [0, 0, 0], sizes = [10, 16, 128], strides = [1, 1, 1]} : vector<10x18x128xbf16> to vector<10x16x128xbf16>
    %7 = vector.extract_strided_slice %6 {offsets = [0, 0, 0], sizes = [8, 16, 128], strides = [1, 1, 1]} : vector<10x16x128xbf16> to vector<8x16x128xbf16>
    %8 = vector.shape_cast %7 : vector<8x16x128xbf16> to vector<128x128xbf16>
    %c0_2 = arith.constant 0 : index
    %c0_3 = arith.constant 0 : index
    %c0_4 = arith.constant 0 : index
    %c0_5 = arith.constant 0 : index
    %9 = vector.load %arg3[%c0_2, %c0_3, %c0_4, %c0_5] : memref<3x3x128x128xbf16, #tpu.memory_space<vmem>>, vector<1x1x128x128xbf16>
    %10 = vector.shape_cast %9 : vector<1x1x128x128xbf16> to vector<128x128xbf16>
    %cst_6 = arith.constant dense<0.000000e+00> : vector<128x128xf32>
    %11 = tpu.matmul %8, %10, %cst_6 {dimension_numbers = #tpu.dot_dimension_numbers<[1], [0], [0], [1], [0, 0, 1, 1], [], []>} : vector<128x128xbf16>, vector<128x128xbf16>, vector<128x128xf32> -> vector<128x128xf32>
    %12 = arith.addf %5, %11 : vector<128x128xf32>
    %13 = vector.extract_strided_slice %6 {offsets = [1, 0, 0], sizes = [8, 16, 128], strides = [1, 1, 1]} : vector<10x16x128xbf16> to vector<8x16x128xbf16>
    %14 = vector.shape_cast %13 : vector<8x16x128xbf16> to vector<128x128xbf16>
    %c1 = arith.constant 1 : index
    %c0_7 = arith.constant 0 : index
    %c0_8 = arith.constant 0 : index
    %c0_9 = arith.constant 0 : index
    %15 = vector.load %arg3[%c1, %c0_7, %c0_8, %c0_9] : memref<3x3x128x128xbf16, #tpu.memory_space<vmem>>, vector<1x1x128x128xbf16>
    %16 = vector.shape_cast %15 : vector<1x1x128x128xbf16> to vector<128x128xbf16>
    %cst_10 = arith.constant dense<0.000000e+00> : vector<128x128xf32>
    %17 = tpu.matmul %14, %16, %cst_10 {dimension_numbers = #tpu.dot_dimension_numbers<[1], [0], [0], [1], [0, 0, 1, 1], [], []>} : vector<128x128xbf16>, vector<128x128xbf16>, vector<128x128xf32> -> vector<128x128xf32>
    %18 = arith.addf %12, %17 : vector<128x128xf32>
    %19 = vector.extract_strided_slice %6 {offsets = [2, 0, 0], sizes = [8, 16, 128], strides = [1, 1, 1]} : vector<10x16x128xbf16> to vector<8x16x128xbf16>
    %20 = vector.shape_cast %19 : vector<8x16x128xbf16> to vector<128x128xbf16>
    %c2 = arith.constant 2 : index
    %c0_11 = arith.constant 0 : index
    %c0_12 = arith.constant 0 : index
    %c0_13 = arith.constant 0 : index
    %21 = vector.load %arg3[%c2, %c0_11, %c0_12, %c0_13] : memref<3x3x128x128xbf16, #tpu.memory_space<vmem>>, vector<1x1x128x128xbf16>
    %22 = vector.shape_cast %21 : vector<1x1x128x128xbf16> to vector<128x128xbf16>
    %cst_14 = arith.constant dense<0.000000e+00> : vector<128x128xf32>
    %23 = tpu.matmul %20, %22, %cst_14 {dimension_numbers = #tpu.dot_dimension_numbers<[1], [0], [0], [1], [0, 0, 1, 1], [], []>} : vector<128x128xbf16>, vector<128x128xbf16>, vector<128x128xf32> -> vector<128x128xf32>
    %24 = arith.addf %18, %23 : vector<128x128xf32>
    %25 = vector.extract_strided_slice %4 {offsets = [0, 1, 0], sizes = [10, 16, 128], strides = [1, 1, 1]} : vector<10x18x128xbf16> to vector<10x16x128xbf16>
    %26 = vector.extract_strided_slice %25 {offsets = [0, 0, 0], sizes = [8, 16, 128], strides = [1, 1, 1]} : vector<10x16x128xbf16> to vector<8x16x128xbf16>
    %27 = vector.shape_cast %26 : vector<8x16x128xbf16> to vector<128x128xbf16>
    %c0_15 = arith.constant 0 : index
    %c1_16 = arith.constant 1 : index
    %c0_17 = arith.constant 0 : index
    %c0_18 = arith.constant 0 : index
    %28 = vector.load %arg3[%c0_15, %c1_16, %c0_17, %c0_18] : memref<3x3x128x128xbf16, #tpu.memory_space<vmem>>, vector<1x1x128x128xbf16>
    %29 = vector.shape_cast %28 : vector<1x1x128x128xbf16> to vector<128x128xbf16>
    %cst_19 = arith.constant dense<0.000000e+00> : vector<128x128xf32>
    %30 = tpu.matmul %27, %29, %cst_19 {dimension_numbers = #tpu.dot_dimension_numbers<[1], [0], [0], [1], [0, 0, 1, 1], [], []>} : vector<128x128xbf16>, vector<128x128xbf16>, vector<128x128xf32> -> vector<128x128xf32>
    %31 = arith.addf %24, %30 : vector<128x128xf32>
    %32 = vector.extract_strided_slice %25 {offsets = [1, 0, 0], sizes = [8, 16, 128], strides = [1, 1, 1]} : vector<10x16x128xbf16> to vector<8x16x128xbf16>
    %33 = vector.shape_cast %32 : vector<8x16x128xbf16> to vector<128x128xbf16>
    %c1_20 = arith.constant 1 : index
    %c1_21 = arith.constant 1 : index
    %c0_22 = arith.constant 0 : index
    %c0_23 = arith.constant 0 : index
    %34 = vector.load %arg3[%c1_20, %c1_21, %c0_22, %c0_23] : memref<3x3x128x128xbf16, #tpu.memory_space<vmem>>, vector<1x1x128x128xbf16>
    %35 = vector.shape_cast %34 : vector<1x1x128x128xbf16> to vector<128x128xbf16>
    %cst_24 = arith.constant dense<0.000000e+00> : vector<128x128xf32>
    %36 = tpu.matmul %33, %35, %cst_24 {dimension_numbers = #tpu.dot_dimension_numbers<[1], [0], [0], [1], [0, 0, 1, 1], [], []>} : vector<128x128xbf16>, vector<128x128xbf16>, vector<128x128xf32> -> vector<128x128xf32>
    %37 = arith.addf %31, %36 : vector<128x128xf32>
    %38 = vector.extract_strided_slice %25 {offsets = [2, 0, 0], sizes = [8, 16, 128], strides = [1, 1, 1]} : vector<10x16x128xbf16> to vector<8x16x128xbf16>
    %39 = vector.shape_cast %38 : vector<8x16x128xbf16> to vector<128x128xbf16>
    %c2_25 = arith.constant 2 : index
    %c1_26 = arith.constant 1 : index
    %c0_27 = arith.constant 0 : index
    %c0_28 = arith.constant 0 : index
    %40 = vector.load %arg3[%c2_25, %c1_26, %c0_27, %c0_28] : memref<3x3x128x128xbf16, #tpu.memory_space<vmem>>, vector<1x1x128x128xbf16>
    %41 = vector.shape_cast %40 : vector<1x1x128x128xbf16> to vector<128x128xbf16>
    %cst_29 = arith.constant dense<0.000000e+00> : vector<128x128xf32>
    %42 = tpu.matmul %39, %41, %cst_29 {dimension_numbers = #tpu.dot_dimension_numbers<[1], [0], [0], [1], [0, 0, 1, 1], [], []>} : vector<128x128xbf16>, vector<128x128xbf16>, vector<128x128xf32> -> vector<128x128xf32>
    %43 = arith.addf %37, %42 : vector<128x128xf32>
    %44 = vector.extract_strided_slice %4 {offsets = [0, 2, 0], sizes = [10, 16, 128], strides = [1, 1, 1]} : vector<10x18x128xbf16> to vector<10x16x128xbf16>
    %45 = vector.extract_strided_slice %44 {offsets = [0, 0, 0], sizes = [8, 16, 128], strides = [1, 1, 1]} : vector<10x16x128xbf16> to vector<8x16x128xbf16>
    %46 = vector.shape_cast %45 : vector<8x16x128xbf16> to vector<128x128xbf16>
    %c0_30 = arith.constant 0 : index
    %c2_31 = arith.constant 2 : index
    %c0_32 = arith.constant 0 : index
    %c0_33 = arith.constant 0 : index
    %47 = vector.load %arg3[%c0_30, %c2_31, %c0_32, %c0_33] : memref<3x3x128x128xbf16, #tpu.memory_space<vmem>>, vector<1x1x128x128xbf16>
    %48 = vector.shape_cast %47 : vector<1x1x128x128xbf16> to vector<128x128xbf16>
    %cst_34 = arith.constant dense<0.000000e+00> : vector<128x128xf32>
    %49 = tpu.matmul %46, %48, %cst_34 {dimension_numbers = #tpu.dot_dimension_numbers<[1], [0], [0], [1], [0, 0, 1, 1], [], []>} : vector<128x128xbf16>, vector<128x128xbf16>, vector<128x128xf32> -> vector<128x128xf32>
    %50 = arith.addf %43, %49 : vector<128x128xf32>
    %51 = vector.extract_strided_slice %44 {offsets = [1, 0, 0], sizes = [8, 16, 128], strides = [1, 1, 1]} : vector<10x16x128xbf16> to vector<8x16x128xbf16>
    %52 = vector.shape_cast %51 : vector<8x16x128xbf16> to vector<128x128xbf16>
    %c1_35 = arith.constant 1 : index
    %c2_36 = arith.constant 2 : index
    %c0_37 = arith.constant 0 : index
    %c0_38 = arith.constant 0 : index
    %53 = vector.load %arg3[%c1_35, %c2_36, %c0_37, %c0_38] : memref<3x3x128x128xbf16, #tpu.memory_space<vmem>>, vector<1x1x128x128xbf16>
    %54 = vector.shape_cast %53 : vector<1x1x128x128xbf16> to vector<128x128xbf16>
    %cst_39 = arith.constant dense<0.000000e+00> : vector<128x128xf32>
    %55 = tpu.matmul %52, %54, %cst_39 {dimension_numbers = #tpu.dot_dimension_numbers<[1], [0], [0], [1], [0, 0, 1, 1], [], []>} : vector<128x128xbf16>, vector<128x128xbf16>, vector<128x128xf32> -> vector<128x128xf32>
    %56 = arith.addf %50, %55 : vector<128x128xf32>
    %57 = vector.extract_strided_slice %44 {offsets = [2, 0, 0], sizes = [8, 16, 128], strides = [1, 1, 1]} : vector<10x16x128xbf16> to vector<8x16x128xbf16>
    %58 = vector.shape_cast %57 : vector<8x16x128xbf16> to vector<128x128xbf16>
    %c2_40 = arith.constant 2 : index
    %c2_41 = arith.constant 2 : index
    %c0_42 = arith.constant 0 : index
    %c0_43 = arith.constant 0 : index
    %59 = vector.load %arg3[%c2_40, %c2_41, %c0_42, %c0_43] : memref<3x3x128x128xbf16, #tpu.memory_space<vmem>>, vector<1x1x128x128xbf16>
    %60 = vector.shape_cast %59 : vector<1x1x128x128xbf16> to vector<128x128xbf16>
    %cst_44 = arith.constant dense<0.000000e+00> : vector<128x128xf32>
    %61 = tpu.matmul %58, %60, %cst_44 {dimension_numbers = #tpu.dot_dimension_numbers<[1], [0], [0], [1], [0, 0, 1, 1], [], []>} : vector<128x128xbf16>, vector<128x128xbf16>, vector<128x128xf32> -> vector<128x128xf32>
    %62 = arith.addf %56, %61 : vector<128x128xf32>
    %c0_45 = arith.constant 0 : index
    %c0_46 = arith.constant 0 : index
    %63 = vector.load %arg4[%c0_45, %c0_46] : memref<1x128xf32, #tpu.memory_space<vmem>>, vector<1x128xf32>
    %64 = vector.broadcast %63 : vector<1x128xf32> to vector<128x128xf32>
    %65 = arith.addf %62, %64 : vector<128x128xf32>
    %cst_47 = arith.constant 0.000000e+00 : f32
    %66 = vector.broadcast %cst_47 : f32 to vector<128x128xf32>
    %67 = arith.maximumf %65, %66 : vector<128x128xf32>
    %68 = vector.extract_strided_slice %4 {offsets = [1, 1, 0], sizes = [8, 16, 128], strides = [1, 1, 1]} : vector<10x18x128xbf16> to vector<8x16x128xbf16>
    %69 = vector.shape_cast %68 : vector<8x16x128xbf16> to vector<128x128xbf16>
    %70 = arith.extf %69 : vector<128x128xbf16> to vector<128x128xf32>
    %71 = arith.addf %67, %70 : vector<128x128xf32>
    %72 = vector.shape_cast %71 : vector<128x128xf32> to vector<8x16x128xf32>
    %c0_48 = arith.constant 0 : index
    %c0_49 = arith.constant 0 : index
    %c0_50 = arith.constant 0 : index
    %c0_51 = arith.constant 0 : index
    %73 = vector.load %arg5[%c0_48, %c0_49, %c0_50, %c0_51] : memref<1x8x16x128xf32, #tpu.memory_space<vmem>>, vector<1x8x16x128xf32>
    %74 = vector.shape_cast %73 : vector<1x8x16x128xf32> to vector<8x16x128xf32>
    %75 = vector.shape_cast %72 : vector<8x16x128xf32> to vector<1x8x16x128xf32>
    tpu.vector_store %arg5[%c0_48, %c0_49, %c0_50, %c0_51], %75 {strides = array<i32>} : memref<1x8x16x128xf32, #tpu.memory_space<vmem>>, vector<1x8x16x128xf32>,
    return
  }
  func.func @transform_0(%arg0: i32, %arg1: i32) -> (i32, i32, i32, i32) {
    %c0_i32 = arith.constant 0 : i32
    %c0_i32_0 = arith.constant 0 : i32
    %c0_i32_1 = arith.constant 0 : i32
    %c0_i32_2 = arith.constant 0 : i32
    return %arg0, %c0_i32, %c0_i32_0, %c0_i32_1 : i32, i32, i32, i32
  }
  func.func @transform_1(%arg0: i32, %arg1: i32) -> (i32, i32, i32, i32) {
    %c0_i32 = arith.constant 0 : i32
    %c0_i32_0 = arith.constant 0 : i32
    %c0_i32_1 = arith.constant 0 : i32
    %c0_i32_2 = arith.constant 0 : i32
    %c0_i32_3 = arith.constant 0 : i32
    return %c0_i32, %c0_i32_0, %c0_i32_1, %c0_i32_2 : i32, i32, i32, i32
  }
  func.func @transform_2(%arg0: i32, %arg1: i32) -> (i32, i32) {
    %c0_i32 = arith.constant 0 : i32
    %c0_i32_0 = arith.constant 0 : i32
    %c0_i32_1 = arith.constant 0 : i32
    return %c0_i32, %c0_i32_0 : i32, i32
  }
  func.func @transform_3(%arg0: i32, %arg1: i32) -> (i32, i32, i32, i32) {
    %c0_i32 = arith.constant 0 : i32
    %c0_i32_0 = arith.constant 0 : i32
    %c0_i32_1 = arith.constant 0 : i32
    return %arg0, %arg1, %c0_i32, %c0_i32_0 : i32, i32, i32, i32
  }
}

</mosaic_0001>

<llo_original>
// kernel: tpu_custom_call.1
$region0: #{tpu_custom_call.1}
  #allocation0 [shape = 'u32[]', space=smem, size = 0x4, offset = 0x4, fixed_abs, tag = 'smem constant byte address 0x4 - core index']
  #allocation1 [shape = 'u32[144,128]{1,0:T(1,128)}', space=vmem, size = 0x12000, scoped, tag = 'internal scratch']
  %s0 = inlined_call_operand.vmem [shape: bf16[2,18,18,128], index: 0, kind: input, shape index: {}]
  %s1 = inlined_call_operand.vmem [shape: bf16[3,3,128,128], index: 1, kind: input, shape index: {}]
  %s2 = inlined_call_operand.vmem [shape: f32[1,128], index: 2, kind: input, shape index: {}]
  %s3 = inlined_call_operand.hbm [shape: f32[2,16,16,128], index: 3, kind: output, shape index: {}]
  %s4 = sld [smem:[#allocation0]]
  $region45: #{tpu_custom_call.1} parent=0
    _
  %s6 = ssub.s32 1, %s4
  %s7 = scalar_select 0, %s6, %s4
  $region1: #{tpu_custom_call.1} parent=0
    #allocation2 [shape = 'u8[131072]{0}', space=vmem, size = 0x20000, scoped, tag = 'output window, operand 0']
    #allocation3 [shape = 's32[2]{0}', space=sflag, size = 0x8, scoped, tag = 'scoped memory for tpu_custom_call.1']
    %8 = vsyncpa [#allocation3], 0
    %s9 = scalar_lea.sflag [#allocation3], 1
    %10 = vsyncpa %s9, 0
    loop: start=0, step=1, limit=6
    $region2: #{tpu_custom_call.1} parent=1 // loop_pre_header
      _
    $region3: #{tpu_custom_call.1} parent=1 // loop_header
      %s12 = sphi 0, %s16
      %p13 = scmp.ge.s32.totalorder %s12, 6
      %s19 = sphi 0, %s31
      %s20 = sphi 0, %s27
      %s21 = sphi 0, %s19
      %s22 = sphi 0, %s20
      %s23 = sphi 0, %s21
      %s24 = sphi 0, %s22
      %s34 = sphi 0, %s36
      %s37 = sphi 0, %s34
      %s38 = sphi 0, %s37
      %s54 = sphi 0, %s38
      %s58 = sphi 0, %s58
      %s60 = sphi 0, %s58
      %s61 = sphi 0, %s60
      %s75 = sphi 0, %s61
      %s79 = sphi 0, %s79
      %s81 = sphi 0, %s79
      %s82 = sphi 0, %s81
      %s96 = sphi 0, %s82
      %s104 = sphi 0, %s106
      %s107 = sphi 0, %s104
      %s108 = sphi 0, %s107
      %s124 = sphi 0, %s108
    $region4: #{tpu_custom_call.1} parent=1 // loop_header_branch
      %15 = sbr.rel (%p13) target = $region8
    $region5: #{tpu_custom_call.1} parent=1 // loop_body
      %s17 = ssub.s32 %s12, 1
      %s18 = ssub.s32 %s12, 2
      %s25 = sadd.s32 1, %s20
      %p26 = scmp.ge.s32.totalorder %s25, 2
      %s27 = scalar_select %p26, 0, %s25
      %s28 = sadd.s32 1, %s19
      %s29 = scalar_select %p26, %s28, %s19
      %p30 = scmp.ge.s32.totalorder %s29, 2
      %s31 = scalar_select %p30, 0, %s29
      %s32 = ssub.s32 %s19, %s31
      %p33 = scmp.eq.s32.totalorder %s32, 0
      %s35 = sadd.s32 %s34, 1
      %s36 = scalar_select %p33, %s34, %s35
      %p39 = pneg %p33
      %p40 = scmp.eq.s32.totalorder %s12, 3
      %p41 = por %p39, %p40
      %p42 = scmp.ne.s32.totalorder %s34, %s37
      %p43 = scmp.eq.s32.totalorder %s12, 0
      %p44 = por %p42, %p43
      %p45 = scmp.ne.s32.totalorder %s34, %s37
      %p46 = scmp.eq.s32.totalorder %s17, 3
      %p47 = por %p45, %p46
      %p48 = scmp.ne.s32.totalorder %s37, %s38
      %p49 = scmp.eq.s32.totalorder %s17, 0
      %p50 = por %p48, %p49
      %p51 = scmp.ne.s32.totalorder %s37, %s38
      %p52 = scmp.eq.s32.totalorder %s18, 3
      %p53 = por %p51, %p52
      %p55 = scmp.ne.s32.totalorder %s38, %s54
      %p56 = scmp.eq.s32.totalorder %s18, 0
      %p57 = por %p55, %p56
      %s59 = sadd.s32 %s58, 1
      %p62 = scmp.eq.s32.totalorder %s12, 3
      %p63 = scmp.ne.s32.totalorder %s58, %s60
      %p64 = scmp.eq.s32.totalorder %s12, 0
      %p65 = por %p63, %p64
      %p66 = scmp.ne.s32.totalorder %s58, %s60
      %p67 = scmp.eq.s32.totalorder %s17, 3
      %p68 = por %p66, %p67
      %p69 = scmp.ne.s32.totalorder %s60, %s61
      %p70 = scmp.eq.s32.totalorder %s17, 0
      %p71 = por %p69, %p70
      %p72 = scmp.ne.s32.totalorder %s60, %s61
      %p73 = scmp.eq.s32.totalorder %s18, 3
      %p74 = por %p72, %p73
      %p76 = scmp.ne.s32.totalorder %s61, %s75
      %p77 = scmp.eq.s32.totalorder %s18, 0
      %p78 = por %p76, %p77
      %s80 = sadd.s32 %s79, 1
      %p83 = scmp.eq.s32.totalorder %s12, 3
      %p84 = scmp.ne.s32.totalorder %s79, %s81
      %p85 = scmp.eq.s32.totalorder %s12, 0
      %p86 = por %p84, %p85
      %p87 = scmp.ne.s32.totalorder %s79, %s81
      %p88 = scmp.eq.s32.totalorder %s17, 3
      %p89 = por %p87, %p88
      %p90 = scmp.ne.s32.totalorder %s81, %s82
      %p91 = scmp.eq.s32.totalorder %s17, 0
      %p92 = por %p90, %p91
      %p93 = scmp.ne.s32.totalorder %s81, %s82
      %p94 = scmp.eq.s32.totalorder %s18, 3
      %p95 = por %p93, %p94
      %p97 = scmp.ne.s32.totalorder %s82, %s96
      %p98 = scmp.eq.s32.totalorder %s18, 0
      %p99 = por %p97, %p98
      %s100 = ssub.s32 %s19, %s31
      %s101 = ssub.s32 %s20, %s27
      %s102 = sor.u32 %s100, %s101
      %p103 = scmp.eq.s32.totalorder %s102, 0
      %s105 = sadd.s32 %s104, 1
      %s106 = scalar_select %p103, %s104, %s105
      %p109 = pneg %p103
      %p110 = scmp.eq.s32.totalorder %s12, 3
      %p111 = por %p109, %p110
      %p112 = scmp.ne.s32.totalorder %s104, %s107
      %p113 = scmp.eq.s32.totalorder %s12, 0
      %p114 = por %p112, %p113
      %p115 = scmp.ne.s32.totalorder %s104, %s107
      %p116 = scmp.eq.s32.totalorder %s17, 3
      %p117 = por %p115, %p116
      %p118 = scmp.ne.s32.totalorder %s107, %s108
      %p119 = scmp.eq.s32.totalorder %s17, 0
      %p120 = por %p118, %p119
      %p121 = scmp.ne.s32.totalorder %s107, %s108
      %p122 = scmp.eq.s32.totalorder %s18, 3
      %p123 = por %p121, %p122
      %p125 = scmp.ne.s32.totalorder %s108, %s124
      %p126 = scmp.eq.s32.totalorder %s18, 0
      %p127 = por %p125, %p126
      %p128 = scmp.le.s32.totalorder 1, %s12
      %p129 = scmp.lt.s32.totalorder %s12, 5
      %p130 = pnand %p128, %p129
      %p131 = pneg %p130
      // Predicated region
      $region9: #{tpu_custom_call.1} parent=5 // pred_check
        _
      $region10: #{tpu_custom_call.1} parent=5 // pred_check_branch
        %133 = sbr.rel (%p130) target = $region12
      $region11: #{tpu_custom_call.1} parent=5 // pred_region
        %s134 = ssub.s32 %s12, 1
        // Predicated region
        $region13: #{tpu_custom_call.1} parent=11 // pred_check
          %p135 = pneg %p71
        $region14: #{tpu_custom_call.1} parent=11 // pred_check_branch
          %137 = sbr.rel (%p135) target = $region16
        $region15: #{tpu_custom_call.1} parent=11 // pred_region
          _
        $region16: #{tpu_custom_call.1} parent=11 // pred_fallthru
          _
        // Predicated region
        $region17: #{tpu_custom_call.1} parent=11 // pred_check
          %p138 = pneg %p92
        $region18: #{tpu_custom_call.1} parent=11 // pred_check_branch
          %140 = sbr.rel (%p138) target = $region20
        $region19: #{tpu_custom_call.1} parent=11 // pred_region
          _
        $region20: #{tpu_custom_call.1} parent=11 // pred_fallthru
          _
      $region12: #{tpu_custom_call.1} parent=5 // pred_fallthru
        _
      %p141 = scmp.lt.s32.totalorder %s12, 4
      // Predicated region
      $region21: #{tpu_custom_call.1} parent=5 // pred_check
        %p142 = pneg %p141
      $region22: #{tpu_custom_call.1} parent=5 // pred_check_branch
        %144 = sbr.rel (%p142) target = $region24
      $region23: #{tpu_custom_call.1} parent=5 // pred_region
        // Predicated region
        $region25: #{tpu_custom_call.1} parent=23 // pred_check
          %p145 = pneg %p44
        $region26: #{tpu_custom_call.1} parent=23 // pred_check_branch
          %147 = sbr.rel (%p145) target = $region28
        $region27: #{tpu_custom_call.1} parent=23 // pred_region
          %p148 = scmp.lt.s32.totalorder %s19, 1
          %s149 = scalar_select %p148, %s19, 1
          %s150 = smul.addr %s149, 54
          %s151 = smul.addr %s150, 4
          %s152 = scalar_lea.vmem %s0, %s151
        $region28: #{tpu_custom_call.1} parent=23 // pred_fallthru
          _
      $region24: #{tpu_custom_call.1} parent=5 // pred_fallthru
        _
      %p153 = scmp.le.s32.totalorder 1, %s12
      %p154 = scmp.lt.s32.totalorder %s12, 5
      %p155 = pnand %p153, %p154
      %p156 = pneg %p155
      // Predicated region
      $region29: #{tpu_custom_call.1} parent=5 // pred_check
        _
      $region30: #{tpu_custom_call.1} parent=5 // pred_check_branch
        %158 = sbr.rel (%p155) target = $region32
      $region31: #{tpu_custom_call.1} parent=5 // pred_region
        %s159 = ssub.s32 %s12, 1
        %p160 = scmp.lt.s32.totalorder %s21, 1
        %s161 = scalar_select %p160, %s21, 1
        %s162 = smul.addr %s161, 54
        %s163 = smul.addr %s162, 4
        %s164 = scalar_lea.vmem %s0, %s163
        %p165 = pneg %p50
        %p166 = pneg %p47
        %p167 = pneg %p71
        %p168 = pneg %p68
        %p169 = pneg %p92
        %p170 = pneg %p89
        %p171 = pneg %p120
        %p172 = pneg %p117
        %s173 = sand.u32 %s107, 1
        %s174 = scalar_lea.sflag [#allocation3], %s173
        %s175 = sand.u32 %s107, 1
        %s176 = smul.addr %s175, 128
        %s177 = scalar_lea.vmem [#allocation2], %s176
        %p178 = scmp.lt.s32.totalorder %s21, 1
        %s179 = scalar_select %p178, %s21, 1
        %s180 = smul.addr %s179, 54
        %s181 = smul.addr %s180, 4
        %s182 = scalar_lea.vmem %s0, %s181
        %s183 = smul.u32 8, %s22
        %s185 = smul.u32 %s22, 8
        %s186 = smul.u32 %s185, 3
        %s187 = smul.addr %s186, 4
        %s188 = scalar_lea.vmem %s182, %s187
        %v189 = vld [vmem:[%s188] sm:$0xf]
        %v190 = vld [vmem:[%s188 + $0x4] sm:$0xf]
        %v191 = vld [vmem:[%s188 + $0x8] sm:$0x1]
        %v192 = vld [vmem:[%s188 + $0xc] sm:$0xf]
        %v193 = vld [vmem:[%s188 + $0x10] sm:$0xf]
        %v194 = vld [vmem:[%s188 + $0x14] sm:$0x1]
        %v195 = vld [vmem:[%s188 + $0x18] sm:$0xf]
        %v196 = vld [vmem:[%s188 + $0x1c] sm:$0xf]
        %v197 = vld [vmem:[%s188 + $0x20] sm:$0x1]
        %v198 = vld [vmem:[%s188 + $0x24] sm:$0xf]
        %v199 = vld [vmem:[%s188 + $0x28] sm:$0xf]
        %v200 = vld [vmem:[%s188 + $0x2c] sm:$0x1]
        %v201 = vld [vmem:[%s188 + $0x30] sm:$0xf]
        %v202 = vld [vmem:[%s188 + $0x34] sm:$0xf]
        %v203 = vld [vmem:[%s188 + $0x38] sm:$0x1]
        %v204 = vld [vmem:[%s188 + $0x3c] sm:$0xf]
        %v205 = vld [vmem:[%s188 + $0x40] sm:$0xf]
        %v206 = vld [vmem:[%s188 + $0x44] sm:$0x1]
        %v207 = vld [vmem:[%s188 + $0x48] sm:$0xf]
        %v208 = vld [vmem:[%s188 + $0x4c] sm:$0xf]
        %v209 = vld [vmem:[%s188 + $0x50] sm:$0x1]
        %v210 = vld [vmem:[%s188 + $0x54] sm:$0xf]
        %v211 = vld [vmem:[%s188 + $0x58] sm:$0xf]
        %v212 = vld [vmem:[%s188 + $0x5c] sm:$0x1]
        %v213 = vld [vmem:[%s188 + $0x60] sm:$0xf]
        %v214 = vld [vmem:[%s188 + $0x64] sm:$0xf]
        %v215 = vld [vmem:[%s188 + $0x68] sm:$0x1]
        %v216 = vld [vmem:[%s188 + $0x6c] sm:$0xf]
        %v217 = vld [vmem:[%s188 + $0x70] sm:$0xf]
        %v218 = vld [vmem:[%s188 + $0x74] sm:$0x1]
        %v219 = vld [vmem:[%s1] sm:$0xf]
        %v220 = vld [vmem:[%s1 + $0x4] sm:$0xf]
        %v221 = vld [vmem:[%s1 + $0x8] sm:$0xf]
        %v222 = vld [vmem:[%s1 + $0xc] sm:$0xf]
        %v223 = vld [vmem:[%s1 + $0x10] sm:$0xf]
        %v224 = vld [vmem:[%s1 + $0x14] sm:$0xf]
        %v225 = vld [vmem:[%s1 + $0x18] sm:$0xf]
        %v226 = vld [vmem:[%s1 + $0x1c] sm:$0xf]
        %v227 = vld [vmem:[%s1 + $0x20] sm:$0xf]
        %v228 = vld [vmem:[%s1 + $0x24] sm:$0xf]
        %v229 = vld [vmem:[%s1 + $0x28] sm:$0xf]
        %v230 = vld [vmem:[%s1 + $0x2c] sm:$0xf]
        %v231 = vld [vmem:[%s1 + $0x30] sm:$0xf]
        %v232 = vld [vmem:[%s1 + $0x34] sm:$0xf]
        %v233 = vld [vmem:[%s1 + $0x38] sm:$0xf]
        %v234 = vld [vmem:[%s1 + $0x3c] sm:$0xf]
        %s235 = scalar_lea.vmem %s1, 192
        %v236 = vld [vmem:[%s235] sm:$0xf]
        %v237 = vld [vmem:[%s235 + $0x4] sm:$0xf]
        %v238 = vld [vmem:[%s235 + $0x8] sm:$0xf]
        %v239 = vld [vmem:[%s235 + $0xc] sm:$0xf]
        %v240 = vld [vmem:[%s235 + $0x10] sm:$0xf]
        %v241 = vld [vmem:[%s235 + $0x14] sm:$0xf]
        %v242 = vld [vmem:[%s235 + $0x18] sm:$0xf]
        %v243 = vld [vmem:[%s235 + $0x1c] sm:$0xf]
        %v244 = vld [vmem:[%s235 + $0x20] sm:$0xf]
        %v245 = vld [vmem:[%s235 + $0x24] sm:$0xf]
        %v246 = vld [vmem:[%s235 + $0x28] sm:$0xf]
        %v247 = vld [vmem:[%s235 + $0x2c] sm:$0xf]
        %v248 = vld [vmem:[%s235 + $0x30] sm:$0xf]
        %v249 = vld [vmem:[%s235 + $0x34] sm:$0xf]
        %v250 = vld [vmem:[%s235 + $0x38] sm:$0xf]
        %v251 = vld [vmem:[%s235 + $0x3c] sm:$0xf]
        %v268 = vunpack.c.l.b16 %v192
        %v269 = vunpack.c.l.b16 %v193
        %v270 = vunpack.c.l.b16 %v195
        %v271 = vunpack.c.l.b16 %v196
        %v272 = vunpack.c.l.b16 %v198
        %v273 = vunpack.c.l.b16 %v199
        %v274 = vunpack.c.l.b16 %v201
        %v275 = vunpack.c.l.b16 %v202
        %v276 = vunpack.c.l.b16 %v204
        %v277 = vunpack.c.l.b16 %v205
        %v278 = vunpack.c.l.b16 %v207
        %v279 = vunpack.c.l.b16 %v208
        %v280 = vunpack.c.l.b16 %v210
        %v281 = vunpack.c.l.b16 %v211
        %v282 = vunpack.c.l.b16 %v213
        %v283 = vunpack.c.l.b16 %v214
        %v284 = vpack.c.b16 %v269, %v268
        %v285 = vpack.c.b16 %v271, %v270
        %v286 = vpack.c.b16 %v273, %v272
        %v287 = vpack.c.b16 %v275, %v274
        %v288 = vpack.c.b16 %v277, %v276
        %v289 = vpack.c.b16 %v279, %v278
        %v290 = vpack.c.b16 %v281, %v280
        %v291 = vpack.c.b16 %v283, %v282
        %v316 = vunpack.c.l.b16 %v236
        %v317 = vunpack.c.l.b16 %v237
        %v318 = vunpack.c.l.b16 %v238
        %v319 = vunpack.c.l.b16 %v239
        %v320 = vunpack.c.l.b16 %v240
        %v321 = vunpack.c.l.b16 %v241
        %v322 = vunpack.c.l.b16 %v242
        %v323 = vunpack.c.l.b16 %v243
        %v324 = vunpack.c.l.b16 %v244
        %v325 = vunpack.c.l.b16 %v245
        %v326 = vunpack.c.l.b16 %v246
        %v327 = vunpack.c.l.b16 %v247
        %v328 = vunpack.c.l.b16 %v248
        %v329 = vunpack.c.l.b16 %v249
        %v330 = vunpack.c.l.b16 %v250
        %v331 = vunpack.c.l.b16 %v251
        %v332 = vpack.c.b16 %v317, %v316
        %v333 = vpack.c.b16 %v319, %v318
        %v334 = vpack.c.b16 %v321, %v320
        %v335 = vpack.c.b16 %v323, %v322
        %v336 = vpack.c.b16 %v325, %v324
        %v337 = vpack.c.b16 %v327, %v326
        %v338 = vpack.c.b16 %v329, %v328
        %v339 = vpack.c.b16 %v331, %v330
        %348 = vmatprep.subr.bf16.mxu0 0
        %349 = vmatpush1.bf16.msra.mxu0 %v332
        %350 = vmatprep.subr.bf16.mxu0 0
        %351 = vmatpush1.bf16.msra.mxu0 %v333
        %352 = vmatprep.subr.bf16.mxu0 0
        %353 = vmatpush1.bf16.msra.mxu0 %v334
        %354 = vmatprep.subr.bf16.mxu0 0
        %355 = vmatpush1.bf16.msra.mxu0 %v335
        %356 = vmatprep.subr.bf16.mxu0 0
        %357 = vmatpush1.bf16.msra.mxu0 %v336
        %358 = vmatprep.subr.bf16.mxu0 0
        %359 = vmatpush1.bf16.msra.mxu0 %v337
        %360 = vmatprep.subr.bf16.mxu0 0
        %361 = vmatpush1.bf16.msra.mxu0 %v338
        %362 = vmatprep.subr.bf16.mxu0 0
        %363 = vmatpush1.bf16.msra.mxu0 %v339
        %364 = vmatprep.subr.bf16.mxu0 0
        %365 = vmatpush1.bf16.msra.mxu0 0
        %366 = vmatprep.subr.bf16.mxu0 0
        %367 = vmatpush1.bf16.msra.mxu0 0
        %368 = vmatprep.subr.bf16.mxu0 0
        %369 = vmatpush1.bf16.msra.mxu0 0
        %370 = vmatprep.subr.bf16.mxu0 0
        %371 = vmatpush1.bf16.msra.mxu0 0
        %372 = vmatprep.subr.bf16.mxu0 0
        %373 = vmatpush1.bf16.msra.mxu0 0
        %374 = vmatprep.subr.bf16.mxu0 0
        %375 = vmatpush1.bf16.msra.mxu0 0
        %376 = vmatprep.subr.bf16.mxu0 0
        %377 = vmatpush1.bf16.msra.mxu0 0
        %378 = vmatprep.subr.bf16.mxu0 0
        %379 = vmatpush1.bf16.msra.mxu0 0
        %380 = vmatprep.mubr.bf16.mxu0 0
        %381 = vmatmul.mubr.bf16.gmra.mrb[0].mxu0 %v284
        %v382 = vpop.f32.mrb[0].mxu0
        %v383 = vadd.f32 0.0, %v382
        %v384 = vpop.f32.mrb[0].mxu0
        %v385 = vpop.f32.mrb[0].mxu0
        %v386 = vadd.f32 0.0, %v385
        %v387 = vpop.f32.mrb[0].mxu0
        %388 = vmatprep.mubr.bf16.mxu0 0
        %389 = vmatmul.mubr.bf16.gmra.mrb[0].mxu0 %v285
        %v390 = vpop.f32.mrb[0].mxu0
        %v391 = vadd.f32 0.0, %v390
        %v392 = vpop.f32.mrb[0].mxu0
        %v393 = vpop.f32.mrb[0].mxu0
        %v394 = vadd.f32 0.0, %v393
        %v395 = vpop.f32.mrb[0].mxu0
        %396 = vmatprep.mubr.bf16.mxu0 0
        %397 = vmatmul.mubr.bf16.gmra.mrb[0].mxu0 %v286
        %v398 = vpop.f32.mrb[0].mxu0
        %v399 = vadd.f32 0.0, %v398
        %v400 = vpop.f32.mrb[0].mxu0
        %v401 = vpop.f32.mrb[0].mxu0
        %v402 = vadd.f32 0.0, %v401
        %v403 = vpop.f32.mrb[0].mxu0
        %404 = vmatprep.mubr.bf16.mxu0 0
        %405 = vmatmul.mubr.bf16.gmra.mrb[0].mxu0 %v287
        %v406 = vpop.f32.mrb[0].mxu0
        %v407 = vadd.f32 0.0, %v406
        %v408 = vpop.f32.mrb[0].mxu0
        %v409 = vpop.f32.mrb[0].mxu0
        %v410 = vadd.f32 0.0, %v409
        %v411 = vpop.f32.mrb[0].mxu0
        %412 = vmatprep.mubr.bf16.mxu0 0
        %413 = vmatmul.mubr.bf16.gmra.mrb[0].mxu0 %v288
        %v414 = vpop.f32.mrb[0].mxu0
        %v415 = vadd.f32 0.0, %v414
        %v416 = vpop.f32.mrb[0].mxu0
        %v417 = vpop.f32.mrb[0].mxu0
        %v418 = vadd.f32 0.0, %v417
        %v419 = vpop.f32.mrb[0].mxu0
        %420 = vmatprep.mubr.bf16.mxu0 0
        %421 = vmatmul.mubr.bf16.gmra.mrb[0].mxu0 %v289
        %v422 = vpop.f32.mrb[0].mxu0
        %v423 = vadd.f32 0.0, %v422
        %v424 = vpop.f32.mrb[0].mxu0
        %v425 = vpop.f32.mrb[0].mxu0
        %v426 = vadd.f32 0.0, %v425
        %v427 = vpop.f32.mrb[0].mxu0
        %428 = vmatprep.mubr.bf16.mxu0 0
        %429 = vmatmul.mubr.bf16.gmra.mrb[0].mxu0 %v290
        %v430 = vpop.f32.mrb[0].mxu0
        %v431 = vadd.f32 0.0, %v430
        %v432 = vpop.f32.mrb[0].mxu0
        %v433 = vpop.f32.mrb[0].mxu0
        %v434 = vadd.f32 0.0, %v433
        %v435 = vpop.f32.mrb[0].mxu0
        %436 = vmatprep.mubr.bf16.mxu0 0
        %437 = vmatmul.mubr.bf16.gmra.mrb[0].mxu0 %v291
        %v438 = vpop.f32.mrb[0].mxu0
        %v439 = vadd.f32 0.0, %v438
        %v440 = vpop.f32.mrb[0].mxu0
        %v441 = vpop.f32.mrb[0].mxu0
        %v442 = vadd.f32 0.0, %v441
        %v443 = vpop.f32.mrb[0].mxu0
        %444 = vdwg.mxu0
        %v447 = vunpack.c.l.b16 %v189
        %v448 = vunpack.c.l.b16 %v190
        %v449 = vpack.c.b16 %v448, %v447
        %v467 = vunpack.c.l.b16 %v219
        %v468 = vunpack.c.l.b16 %v220
        %v469 = vunpack.c.l.b16 %v221
        %v470 = vunpack.c.l.b16 %v222
        %v471 = vunpack.c.l.b16 %v223
        %v472 = vunpack.c.l.b16 %v224
        %v473 = vunpack.c.l.b16 %v225
        %v474 = vunpack.c.l.b16 %v226
        %v475 = vunpack.c.l.b16 %v227
        %v476 = vunpack.c.l.b16 %v228
        %v477 = vunpack.c.l.b16 %v229
        %v478 = vunpack.c.l.b16 %v230
        %v479 = vunpack.c.l.b16 %v231
        %v480 = vunpack.c.l.b16 %v232
        %v481 = vunpack.c.l.b16 %v233
        %v482 = vunpack.c.l.b16 %v234
        %v483 = vpack.c.b16 %v468, %v467
        %v484 = vpack.c.b16 %v470, %v469
        %v485 = vpack.c.b16 %v472, %v471
        %v486 = vpack.c.b16 %v474, %v473
        %v487 = vpack.c.b16 %v476, %v475
        %v488 = vpack.c.b16 %v478, %v477
        %v489 = vpack.c.b16 %v480, %v479
        %v490 = vpack.c.b16 %v482, %v481
        %499 = vmatprep.subr.bf16.mxu0 0
        %500 = vmatpush1.bf16.msra.mxu0 %v483
        %501 = vmatprep.subr.bf16.mxu0 0
        %502 = vmatpush1.bf16.msra.mxu0 %v484
        %503 = vmatprep.subr.bf16.mxu0 0
        %504 = vmatpush1.bf16.msra.mxu0 %v485
        %505 = vmatprep.subr.bf16.mxu0 0
        %506 = vmatpush1.bf16.msra.mxu0 %v486
        %507 = vmatprep.subr.bf16.mxu0 0
        %508 = vmatpush1.bf16.msra.mxu0 %v487
        %509 = vmatprep.subr.bf16.mxu0 0
        %510 = vmatpush1.bf16.msra.mxu0 %v488
        %511 = vmatprep.subr.bf16.mxu0 0
        %512 = vmatpush1.bf16.msra.mxu0 %v489
        %513 = vmatprep.subr.bf16.mxu0 0
        %514 = vmatpush1.bf16.msra.mxu0 %v490
        %515 = vmatprep.subr.bf16.mxu0 0
        %516 = vmatpush1.bf16.msra.mxu0 0
        %517 = vmatprep.subr.bf16.mxu0 0
        %518 = vmatpush1.bf16.msra.mxu0 0
        %519 = vmatprep.subr.bf16.mxu0 0
        %520 = vmatpush1.bf16.msra.mxu0 0
        %521 = vmatprep.subr.bf16.mxu0 0
        %522 = vmatpush1.bf16.msra.mxu0 0
        %523 = vmatprep.subr.bf16.mxu0 0
        %524 = vmatpush1.bf16.msra.mxu0 0
        %525 = vmatprep.subr.bf16.mxu0 0
        %526 = vmatpush1.bf16.msra.mxu0 0
        %527 = vmatprep.subr.bf16.mxu0 0
        %528 = vmatpush1.bf16.msra.mxu0 0
        %529 = vmatprep.subr.bf16.mxu0 0
        %530 = vmatpush1.bf16.msra.mxu0 0
        %531 = vmatprep.mubr.bf16.mxu0 0
        %532 = vmatmul.mubr.bf16.gmra.mrb[0].mxu0 %v449
        %v533 = vpop.f32.mrb[0].mxu0
        %v534 = vadd.f32 %v383, %v533
        %v535 = vpop.f32.mrb[0].mxu0
        %v536 = vpop.f32.mrb[0].mxu0
        %v537 = vadd.f32 %v386, %v536
        %v538 = vpop.f32.mrb[0].mxu0
        %539 = vmatprep.mubr.bf16.mxu0 0
        %540 = vmatmul.mubr.bf16.gmra.mrb[0].mxu0 %v284
        %v541 = vpop.f32.mrb[0].mxu0
        %v542 = vadd.f32 %v391, %v541
        %v543 = vpop.f32.mrb[0].mxu0
        %v544 = vpop.f32.mrb[0].mxu0
        %v545 = vadd.f32 %v394, %v544
        %v546 = vpop.f32.mrb[0].mxu0
        %547 = vmatprep.mubr.bf16.mxu0 0
        %548 = vmatmul.mubr.bf16.gmra.mrb[0].mxu0 %v285
        %v549 = vpop.f32.mrb[0].mxu0
        %v550 = vadd.f32 %v399, %v549
        %v551 = vpop.f32.mrb[0].mxu0
        %v552 = vpop.f32.mrb[0].mxu0
        %v553 = vadd.f32 %v402, %v552
        %v554 = vpop.f32.mrb[0].mxu0
        %555 = vmatprep.mubr.bf16.mxu0 0
        %556 = vmatmul.mubr.bf16.gmra.mrb[0].mxu0 %v286
        %v557 = vpop.f32.mrb[0].mxu0
        %v558 = vadd.f32 %v407, %v557
        %v559 = vpop.f32.mrb[0].mxu0
        %v560 = vpop.f32.mrb[0].mxu0
        %v561 = vadd.f32 %v410, %v560
        %v562 = vpop.f32.mrb[0].mxu0
        %563 = vmatprep.mubr.bf16.mxu0 0
        %564 = vmatmul.mubr.bf16.gmra.mrb[0].mxu0 %v287
        %v565 = vpop.f32.mrb[0].mxu0
        %v566 = vadd.f32 %v415, %v565
        %v567 = vpop.f32.mrb[0].mxu0
        %v568 = vpop.f32.mrb[0].mxu0
        %v569 = vadd.f32 %v418, %v568
        %v570 = vpop.f32.mrb[0].mxu0
        %571 = vmatprep.mubr.bf16.mxu0 0
        %572 = vmatmul.mubr.bf16.gmra.mrb[0].mxu0 %v288
        %v573 = vpop.f32.mrb[0].mxu0
        %v574 = vadd.f32 %v423, %v573
        %v575 = vpop.f32.mrb[0].mxu0
        %v576 = vpop.f32.mrb[0].mxu0
        %v577 = vadd.f32 %v426, %v576
        %v578 = vpop.f32.mrb[0].mxu0
        %579 = vmatprep.mubr.bf16.mxu0 0
        %580 = vmatmul.mubr.bf16.gmra.mrb[0].mxu0 %v289
        %v581 = vpop.f32.mrb[0].mxu0
        %v582 = vadd.f32 %v431, %v581
        %v583 = vpop.f32.mrb[0].mxu0
        %v584 = vpop.f32.mrb[0].mxu0
        %v585 = vadd.f32 %v434, %v584
        %v586 = vpop.f32.mrb[0].mxu0
        %587 = vmatprep.mubr.bf16.mxu0 0
        %588 = vmatmul.mubr.bf16.gmra.mrb[0].mxu0 %v290
        %v589 = vpop.f32.mrb[0].mxu0
        %v590 = vadd.f32 %v439, %v589
        %v591 = vpop.f32.mrb[0].mxu0
        %v592 = vpop.f32.mrb[0].mxu0
        %v593 = vadd.f32 %v442, %v592
        %v594 = vpop.f32.mrb[0].mxu0
        %595 = vdwg.mxu0
        %s596 = scalar_lea.vmem %s1, 384
        %v597 = vld [vmem:[%s596] sm:$0xf]
        %v598 = vld [vmem:[%s596 + $0x4] sm:$0xf]
        %v599 = vld [vmem:[%s596 + $0x8] sm:$0xf]
        %v600 = vld [vmem:[%s596 + $0xc] sm:$0xf]
        %v601 = vld [vmem:[%s596 + $0x10] sm:$0xf]
        %v602 = vld [vmem:[%s596 + $0x14] sm:$0xf]
        %v603 = vld [vmem:[%s596 + $0x18] sm:$0xf]
        %v604 = vld [vmem:[%s596 + $0x1c] sm:$0xf]
        %v605 = vld [vmem:[%s596 + $0x20] sm:$0xf]
        %v606 = vld [vmem:[%s596 + $0x24] sm:$0xf]
        %v607 = vld [vmem:[%s596 + $0x28] sm:$0xf]
        %v608 = vld [vmem:[%s596 + $0x2c] sm:$0xf]
        %v609 = vld [vmem:[%s596 + $0x30] sm:$0xf]
        %v610 = vld [vmem:[%s596 + $0x34] sm:$0xf]
        %v611 = vld [vmem:[%s596 + $0x38] sm:$0xf]
        %v612 = vld [vmem:[%s596 + $0x3c] sm:$0xf]
        %v615 = vunpack.c.l.b16 %v216
        %v616 = vunpack.c.l.b16 %v217
        %v617 = vpack.c.b16 %v616, %v615
        %v635 = vunpack.c.l.b16 %v597
        %v636 = vunpack.c.l.b16 %v598
        %v637 = vunpack.c.l.b16 %v599
        %v638 = vunpack.c.l.b16 %v600
        %v639 = vunpack.c.l.b16 %v601
        %v640 = vunpack.c.l.b16 %v602
        %v641 = vunpack.c.l.b16 %v603
        %v642 = vunpack.c.l.b16 %v604
        %v643 = vunpack.c.l.b16 %v605
        %v644 = vunpack.c.l.b16 %v606
        %v645 = vunpack.c.l.b16 %v607
        %v646 = vunpack.c.l.b16 %v608
        %v647 = vunpack.c.l.b16 %v609
        %v648 = vunpack.c.l.b16 %v610
        %v649 = vunpack.c.l.b16 %v611
        %v650 = vunpack.c.l.b16 %v612
        %v651 = vpack.c.b16 %v636, %v635
        %v652 = vpack.c.b16 %v638, %v637
        %v653 = vpack.c.b16 %v640, %v639
        %v654 = vpack.c.b16 %v642, %v641
        %v655 = vpack.c.b16 %v644, %v643
        %v656 = vpack.c.b16 %v646, %v645
        %v657 = vpack.c.b16 %v648, %v647
        %v658 = vpack.c.b16 %v650, %v649
        %667 = vmatprep.subr.bf16.mxu0 0
        %668 = vmatpush1.bf16.msra.mxu0 %v651
        %669 = vmatprep.subr.bf16.mxu0 0
        %670 = vmatpush1.bf16.msra.mxu0 %v652
        %671 = vmatprep.subr.bf16.mxu0 0
        %672 = vmatpush1.bf16.msra.mxu0 %v653
        %673 = vmatprep.subr.bf16.mxu0 0
        %674 = vmatpush1.bf16.msra.mxu0 %v654
        %675 = vmatprep.subr.bf16.mxu0 0
        %676 = vmatpush1.bf16.msra.mxu0 %v655
        %677 = vmatprep.subr.bf16.mxu0 0
        %678 = vmatpush1.bf16.msra.mxu0 %v656
        %679 = vmatprep.subr.bf16.mxu0 0
        %680 = vmatpush1.bf16.msra.mxu0 %v657
        %681 = vmatprep.subr.bf16.mxu0 0
        %682 = vmatpush1.bf16.msra.mxu0 %v658
        %683 = vmatprep.subr.bf16.mxu0 0
        %684 = vmatpush1.bf16.msra.mxu0 0
        %685 = vmatprep.subr.bf16.mxu0 0
        %686 = vmatpush1.bf16.msra.mxu0 0
        %687 = vmatprep.subr.bf16.mxu0 0
        %688 = vmatpush1.bf16.msra.mxu0 0
        %689 = vmatprep.subr.bf16.mxu0 0
        %690 = vmatpush1.bf16.msra.mxu0 0
        %691 = vmatprep.subr.bf16.mxu0 0
        %692 = vmatpush1.bf16.msra.mxu0 0
        %693 = vmatprep.subr.bf16.mxu0 0
        %694 = vmatpush1.bf16.msra.mxu0 0
        %695 = vmatprep.subr.bf16.mxu0 0
        %696 = vmatpush1.bf16.msra.mxu0 0
        %697 = vmatprep.subr.bf16.mxu0 0
        %698 = vmatpush1.bf16.msra.mxu0 0
        %699 = vmatprep.mubr.bf16.mxu0 0
        %700 = vmatmul.mubr.bf16.gmra.mrb[0].mxu0 %v285
        %v701 = vpop.f32.mrb[0].mxu0
        %v702 = vadd.f32 0.0, %v701
        %v703 = vpop.f32.mrb[0].mxu0
        %v704 = vpop.f32.mrb[0].mxu0
        %v705 = vadd.f32 0.0, %v704
        %v706 = vpop.f32.mrb[0].mxu0
        %707 = vmatprep.mubr.bf16.mxu0 0
        %708 = vmatmul.mubr.bf16.gmra.mrb[0].mxu0 %v286
        %v709 = vpop.f32.mrb[0].mxu0
        %v710 = vadd.f32 0.0, %v709
        %v711 = vpop.f32.mrb[0].mxu0
        %v712 = vpop.f32.mrb[0].mxu0
        %v713 = vadd.f32 0.0, %v712
        %v714 = vpop.f32.mrb[0].mxu0
        %715 = vmatprep.mubr.bf16.mxu0 0
        %716 = vmatmul.mubr.bf16.gmra.mrb[0].mxu0 %v287
        %v717 = vpop.f32.mrb[0].mxu0
        %v718 = vadd.f32 0.0, %v717
        %v719 = vpop.f32.mrb[0].mxu0
        %v720 = vpop.f32.mrb[0].mxu0
        %v721 = vadd.f32 0.0, %v720
        %v722 = vpop.f32.mrb[0].mxu0
        %723 = vmatprep.mubr.bf16.mxu0 0
        %724 = vmatmul.mubr.bf16.gmra.mrb[0].mxu0 %v288
        %v725 = vpop.f32.mrb[0].mxu0
        %v726 = vadd.f32 0.0, %v725
        %v727 = vpop.f32.mrb[0].mxu0
        %v728 = vpop.f32.mrb[0].mxu0
        %v729 = vadd.f32 0.0, %v728
        %v730 = vpop.f32.mrb[0].mxu0
        %731 = vmatprep.mubr.bf16.mxu0 0
        %732 = vmatmul.mubr.bf16.gmra.mrb[0].mxu0 %v289
        %v733 = vpop.f32.mrb[0].mxu0
        %v734 = vadd.f32 0.0, %v733
        %v735 = vpop.f32.mrb[0].mxu0
        %v736 = vpop.f32.mrb[0].mxu0
        %v737 = vadd.f32 0.0, %v736
        %v738 = vpop.f32.mrb[0].mxu0
        %739 = vmatprep.mubr.bf16.mxu0 0
        %740 = vmatmul.mubr.bf16.gmra.mrb[0].mxu0 %v290
        %v741 = vpop.f32.mrb[0].mxu0
        %v742 = vadd.f32 0.0, %v741
        %v743 = vpop.f32.mrb[0].mxu0
        %v744 = vpop.f32.mrb[0].mxu0
        %v745 = vadd.f32 0.0, %v744
        %v746 = vpop.f32.mrb[0].mxu0
        %747 = vmatprep.mubr.bf16.mxu0 0
        %748 = vmatmul.mubr.bf16.gmra.mrb[0].mxu0 %v291
        %v749 = vpop.f32.mrb[0].mxu0
        %v750 = vadd.f32 0.0, %v749
        %v751 = vpop.f32.mrb[0].mxu0
        %v752 = vpop.f32.mrb[0].mxu0
        %v753 = vadd.f32 0.0, %v752
        %v754 = vpop.f32.mrb[0].mxu0
        %755 = vmatprep.mubr.bf16.mxu0 0
        %756 = vmatmul.mubr.bf16.gmra.mrb[0].mxu0 %v617
        %v757 = vpop.f32.mrb[0].mxu0
        %v758 = vadd.f32 0.0, %v757
        %v759 = vpop.f32.mrb[0].mxu0
        %v760 = vpop.f32.mrb[0].mxu0
        %v761 = vadd.f32 0.0, %v760
        %v762 = vpop.f32.mrb[0].mxu0
        %763 = vdwg.mxu0
        %v764 = vadd.f32 %v534, %v702
        %v765 = vadd.f32 %v537, %v705
        %v766 = vadd.f32 %v542, %v710
        %v767 = vadd.f32 %v545, %v713
        %v768 = vadd.f32 %v550, %v718
        %v769 = vadd.f32 %v553, %v721
        %v770 = vadd.f32 %v558, %v726
        %v771 = vadd.f32 %v561, %v729
        %v772 = vadd.f32 %v566, %v734
        %v773 = vadd.f32 %v569, %v737
        %v774 = vadd.f32 %v574, %v742
        %v775 = vadd.f32 %v577, %v745
        %v776 = vadd.f32 %v582, %v750
        %v777 = vadd.f32 %v585, %v753
        %v778 = vadd.f32 %v590, %v758
        %v779 = vadd.f32 %v593, %v761
        %vm780 = vsmask.f32 3328
        %vm781 = vsmask.f32 7440
        %vm782 = vmor %vm780, %vm781
        %v784 = vshrl.u32 %v189, 16
        %v786 = vrot.slane %v784, 4
        %v787 = vshll.u32 %v189, 16
        %v789 = vrot.slane %v787, 5
        %v790 = vor.u32 %v786, %v789
        %v791 = vrot.slane %v790, 4
        %v793 = vshll.u32 %v190, 16
        %v795 = vrot.slane %v793, 5
        %v796 = vsel %vm782, %v791, %v795
        %v797 = vshrl.u32 %v190, 16
        %v799 = vrot.slane %v797, 4
        %v800 = vor.u32 %v799, %v795
        %v801 = vrot.slane %v800, 4
        %v803 = vshll.u32 %v191, 16
        %v805 = vrot.slane %v803, 5
        %v806 = vsel %vm782, %v801, %v805
        %v808 = vshrl.u32 %v192, 16
        %v810 = vrot.slane %v808, 4
        %v811 = vshll.u32 %v192, 16
        %v813 = vrot.slane %v811, 5
        %v814 = vor.u32 %v810, %v813
        %v815 = vrot.slane %v814, 4
        %v817 = vshll.u32 %v193, 16
        %v819 = vrot.slane %v817, 5
        %v820 = vsel %vm782, %v815, %v819
        %v821 = vshrl.u32 %v193, 16
        %v823 = vrot.slane %v821, 4
        %v824 = vor.u32 %v823, %v819
        %v825 = vrot.slane %v824, 4
        %v827 = vshll.u32 %v194, 16
        %v829 = vrot.slane %v827, 5
        %v830 = vsel %vm782, %v825, %v829
        %v832 = vshrl.u32 %v195, 16
        %v834 = vrot.slane %v832, 4
        %v835 = vshll.u32 %v195, 16
        %v837 = vrot.slane %v835, 5
        %v838 = vor.u32 %v834, %v837
        %v839 = vrot.slane %v838, 4
        %v841 = vshll.u32 %v196, 16
        %v843 = vrot.slane %v841, 5
        %v844 = vsel %vm782, %v839, %v843
        %v845 = vshrl.u32 %v196, 16
        %v847 = vrot.slane %v845, 4
        %v848 = vor.u32 %v847, %v843
        %v849 = vrot.slane %v848, 4
        %v851 = vshll.u32 %v197, 16
        %v853 = vrot.slane %v851, 5
        %v854 = vsel %vm782, %v849, %v853
        %v856 = vshrl.u32 %v198, 16
        %v858 = vrot.slane %v856, 4
        %v859 = vshll.u32 %v198, 16
        %v861 = vrot.slane %v859, 5
        %v862 = vor.u32 %v858, %v861
        %v863 = vrot.slane %v862, 4
        %v865 = vshll.u32 %v199, 16
        %v867 = vrot.slane %v865, 5
        %v868 = vsel %vm782, %v863, %v867
        %v869 = vshrl.u32 %v199, 16
        %v871 = vrot.slane %v869, 4
        %v872 = vor.u32 %v871, %v867
        %v873 = vrot.slane %v872, 4
        %v875 = vshll.u32 %v200, 16
        %v877 = vrot.slane %v875, 5
        %v878 = vsel %vm782, %v873, %v877
        %v880 = vshrl.u32 %v201, 16
        %v882 = vrot.slane %v880, 4
        %v883 = vshll.u32 %v201, 16
        %v885 = vrot.slane %v883, 5
        %v886 = vor.u32 %v882, %v885
        %v887 = vrot.slane %v886, 4
        %v889 = vshll.u32 %v202, 16
        %v891 = vrot.slane %v889, 5
        %v892 = vsel %vm782, %v887, %v891
        %v893 = vshrl.u32 %v202, 16
        %v895 = vrot.slane %v893, 4
        %v896 = vor.u32 %v895, %v891
        %v897 = vrot.slane %v896, 4
        %v899 = vshll.u32 %v203, 16
        %v901 = vrot.slane %v899, 5
        %v902 = vsel %vm782, %v897, %v901
        %v904 = vshrl.u32 %v204, 16
        %v906 = vrot.slane %v904, 4
        %v907 = vshll.u32 %v204, 16
        %v909 = vrot.slane %v907, 5
        %v910 = vor.u32 %v906, %v909
        %v911 = vrot.slane %v910, 4
        %v913 = vshll.u32 %v205, 16
        %v915 = vrot.slane %v913, 5
        %v916 = vsel %vm782, %v911, %v915
        %v917 = vshrl.u32 %v205, 16
        %v919 = vrot.slane %v917, 4
        %v920 = vor.u32 %v919, %v915
        %v921 = vrot.slane %v920, 4
        %v923 = vshll.u32 %v206, 16
        %v925 = vrot.slane %v923, 5
        %v926 = vsel %vm782, %v921, %v925
        %v928 = vshrl.u32 %v207, 16
        %v930 = vrot.slane %v928, 4
        %v931 = vshll.u32 %v207, 16
        %v933 = vrot.slane %v931, 5
        %v934 = vor.u32 %v930, %v933
        %v935 = vrot.slane %v934, 4
        %v937 = vshll.u32 %v208, 16
        %v939 = vrot.slane %v937, 5
        %v940 = vsel %vm782, %v935, %v939
        %v941 = vshrl.u32 %v208, 16
        %v943 = vrot.slane %v941, 4
        %v944 = vor.u32 %v943, %v939
        %v945 = vrot.slane %v944, 4
        %v947 = vshll.u32 %v209, 16
        %v949 = vrot.slane %v947, 5
        %v950 = vsel %vm782, %v945, %v949
        %v952 = vshrl.u32 %v210, 16
        %v954 = vrot.slane %v952, 4
        %v955 = vshll.u32 %v210, 16
        %v957 = vrot.slane %v955, 5
        %v958 = vor.u32 %v954, %v957
        %v959 = vrot.slane %v958, 4
        %v961 = vshll.u32 %v211, 16
        %v963 = vrot.slane %v961, 5
        %v964 = vsel %vm782, %v959, %v963
        %v965 = vshrl.u32 %v211, 16
        %v967 = vrot.slane %v965, 4
        %v968 = vor.u32 %v967, %v963
        %v969 = vrot.slane %v968, 4
        %v971 = vshll.u32 %v212, 16
        %v973 = vrot.slane %v971, 5
        %v974 = vsel %vm782, %v969, %v973
        %s975 = scalar_lea.vmem %s1, 64
        %v976 = vld [vmem:[%s975] sm:$0xf]
        %v977 = vld [vmem:[%s975 + $0x4] sm:$0xf]
        %v978 = vld [vmem:[%s975 + $0x8] sm:$0xf]
        %v979 = vld [vmem:[%s975 + $0xc] sm:$0xf]
        %v980 = vld [vmem:[%s975 + $0x10] sm:$0xf]
        %v981 = vld [vmem:[%s975 + $0x14] sm:$0xf]
        %v982 = vld [vmem:[%s975 + $0x18] sm:$0xf]
        %v983 = vld [vmem:[%s975 + $0x1c] sm:$0xf]
        %v984 = vld [vmem:[%s975 + $0x20] sm:$0xf]
        %v985 = vld [vmem:[%s975 + $0x24] sm:$0xf]
        %v986 = vld [vmem:[%s975 + $0x28] sm:$0xf]
        %v987 = vld [vmem:[%s975 + $0x2c] sm:$0xf]
        %v988 = vld [vmem:[%s975 + $0x30] sm:$0xf]
        %v989 = vld [vmem:[%s975 + $0x34] sm:$0xf]
        %v990 = vld [vmem:[%s975 + $0x38] sm:$0xf]
        %v991 = vld [vmem:[%s975 + $0x3c] sm:$0xf]
        %v992 = vunpack.c.l.b16 %v796
        %v993 = vunpack.c.l.b16 %v806
        %v994 = vunpack.c.l.b16 %v820
        %v995 = vunpack.c.l.b16 %v830
        %v996 = vunpack.c.l.b16 %v844
        %v997 = vunpack.c.l.b16 %v854
        %v998 = vunpack.c.l.b16 %v868
        %v999 = vunpack.c.l.b16 %v878
        %v1000 = vunpack.c.l.b16 %v892
        %v1001 = vunpack.c.l.b16 %v902
        %v1002 = vunpack.c.l.b16 %v916
        %v1003 = vunpack.c.l.b16 %v926
        %v1004 = vunpack.c.l.b16 %v940
        %v1005 = vunpack.c.l.b16 %v950
        %v1006 = vunpack.c.l.b16 %v964
        %v1007 = vunpack.c.l.b16 %v974
        %v1008 = vpack.c.b16 %v993, %v992
        %v1009 = vpack.c.b16 %v995, %v994
        %v1010 = vpack.c.b16 %v997, %v996
        %v1011 = vpack.c.b16 %v999, %v998
        %v1012 = vpack.c.b16 %v1001, %v1000
        %v1013 = vpack.c.b16 %v1003, %v1002
        %v1014 = vpack.c.b16 %v1005, %v1004
        %v1015 = vpack.c.b16 %v1007, %v1006
        %v1040 = vunpack.c.l.b16 %v976
        %v1041 = vunpack.c.l.b16 %v977
        %v1042 = vunpack.c.l.b16 %v978
        %v1043 = vunpack.c.l.b16 %v979
        %v1044 = vunpack.c.l.b16 %v980
        %v1045 = vunpack.c.l.b16 %v981
        %v1046 = vunpack.c.l.b16 %v982
        %v1047 = vunpack.c.l.b16 %v983
        %v1048 = vunpack.c.l.b16 %v984
        %v1049 = vunpack.c.l.b16 %v985
        %v1050 = vunpack.c.l.b16 %v986
        %v1051 = vunpack.c.l.b16 %v987
        %v1052 = vunpack.c.l.b16 %v988
        %v1053 = vunpack.c.l.b16 %v989
        %v1054 = vunpack.c.l.b16 %v990
        %v1055 = vunpack.c.l.b16 %v991
        %v1056 = vpack.c.b16 %v1041, %v1040
        %v1057 = vpack.c.b16 %v1043, %v1042
        %v1058 = vpack.c.b16 %v1045, %v1044
        %v1059 = vpack.c.b16 %v1047, %v1046
        %v1060 = vpack.c.b16 %v1049, %v1048
        %v1061 = vpack.c.b16 %v1051, %v1050
        %v1062 = vpack.c.b16 %v1053, %v1052
        %v1063 = vpack.c.b16 %v1055, %v1054
        %1072 = vmatprep.subr.bf16.mxu0 0
        %1073 = vmatpush1.bf16.msra.mxu0 %v1056
        %1074 = vmatprep.subr.bf16.mxu0 0
        %1075 = vmatpush1.bf16.msra.mxu0 %v1057
        %1076 = vmatprep.subr.bf16.mxu0 0
        %1077 = vmatpush1.bf16.msra.mxu0 %v1058
        %1078 = vmatprep.subr.bf16.mxu0 0
        %1079 = vmatpush1.bf16.msra.mxu0 %v1059
        %1080 = vmatprep.subr.bf16.mxu0 0
        %1081 = vmatpush1.bf16.msra.mxu0 %v1060
        %1082 = vmatprep.subr.bf16.mxu0 0
        %1083 = vmatpush1.bf16.msra.mxu0 %v1061
        %1084 = vmatprep.subr.bf16.mxu0 0
        %1085 = vmatpush1.bf16.msra.mxu0 %v1062
        %1086 = vmatprep.subr.bf16.mxu0 0
        %1087 = vmatpush1.bf16.msra.mxu0 %v1063
        %1088 = vmatprep.subr.bf16.mxu0 0
        %1089 = vmatpush1.bf16.msra.mxu0 0
        %1090 = vmatprep.subr.bf16.mxu0 0
        %1091 = vmatpush1.bf16.msra.mxu0 0
        %1092 = vmatprep.subr.bf16.mxu0 0
        %1093 = vmatpush1.bf16.msra.mxu0 0
        %1094 = vmatprep.subr.bf16.mxu0 0
        %1095 = vmatpush1.bf16.msra.mxu0 0
        %1096 = vmatprep.subr.bf16.mxu0 0
        %1097 = vmatpush1.bf16.msra.mxu0 0
        %1098 = vmatprep.subr.bf16.mxu0 0
        %1099 = vmatpush1.bf16.msra.mxu0 0
        %1100 = vmatprep.subr.bf16.mxu0 0
        %1101 = vmatpush1.bf16.msra.mxu0 0
        %1102 = vmatprep.subr.bf16.mxu0 0
        %1103 = vmatpush1.bf16.msra.mxu0 0
        %1104 = vmatprep.mubr.bf16.mxu0 0
        %1105 = vmatmul.mubr.bf16.gmra.mrb[0].mxu0 %v1008
        %v1106 = vpop.f32.mrb[0].mxu0
        %v1107 = vadd.f32 0.0, %v1106
        %v1108 = vpop.f32.mrb[0].mxu0
        %v1109 = vpop.f32.mrb[0].mxu0
        %v1110 = vadd.f32 0.0, %v1109
        %v1111 = vpop.f32.mrb[0].mxu0
        %1112 = vmatprep.mubr.bf16.mxu0 0
        %1113 = vmatmul.mubr.bf16.gmra.mrb[0].mxu0 %v1009
        %v1114 = vpop.f32.mrb[0].mxu0
        %v1115 = vadd.f32 0.0, %v1114
        %v1116 = vpop.f32.mrb[0].mxu0
        %v1117 = vpop.f32.mrb[0].mxu0
        %v1118 = vadd.f32 0.0, %v1117
        %v1119 = vpop.f32.mrb[0].mxu0
        %1120 = vmatprep.mubr.bf16.mxu0 0
        %1121 = vmatmul.mubr.bf16.gmra.mrb[0].mxu0 %v1010
        %v1122 = vpop.f32.mrb[0].mxu0
        %v1123 = vadd.f32 0.0, %v1122
        %v1124 = vpop.f32.mrb[0].mxu0
        %v1125 = vpop.f32.mrb[0].mxu0
        %v1126 = vadd.f32 0.0, %v1125
        %v1127 = vpop.f32.mrb[0].mxu0
        %1128 = vmatprep.mubr.bf16.mxu0 0
        %1129 = vmatmul.mubr.bf16.gmra.mrb[0].mxu0 %v1011
        %v1130 = vpop.f32.mrb[0].mxu0
        %v1131 = vadd.f32 0.0, %v1130
        %v1132 = vpop.f32.mrb[0].mxu0
        %v1133 = vpop.f32.mrb[0].mxu0
        %v1134 = vadd.f32 0.0, %v1133
        %v1135 = vpop.f32.mrb[0].mxu0
        %1136 = vmatprep.mubr.bf16.mxu0 0
        %1137 = vmatmul.mubr.bf16.gmra.mrb[0].mxu0 %v1012
        %v1138 = vpop.f32.mrb[0].mxu0
        %v1139 = vadd.f32 0.0, %v1138
        %v1140 = vpop.f32.mrb[0].mxu0
        %v1141 = vpop.f32.mrb[0].mxu0
        %v1142 = vadd.f32 0.0, %v1141
        %v1143 = vpop.f32.mrb[0].mxu0
        %1144 = vmatprep.mubr.bf16.mxu0 0
        %1145 = vmatmul.mubr.bf16.gmra.mrb[0].mxu0 %v1013
        %v1146 = vpop.f32.mrb[0].mxu0
        %v1147 = vadd.f32 0.0, %v1146
        %v1148 = vpop.f32.mrb[0].mxu0
        %v1149 = vpop.f32.mrb[0].mxu0
        %v1150 = vadd.f32 0.0, %v1149
        %v1151 = vpop.f32.mrb[0].mxu0
        %1152 = vmatprep.mubr.bf16.mxu0 0
        %1153 = vmatmul.mubr.bf16.gmra.mrb[0].mxu0 %v1014
        %v1154 = vpop.f32.mrb[0].mxu0
        %v1155 = vadd.f32 0.0, %v1154
        %v1156 = vpop.f32.mrb[0].mxu0
        %v1157 = vpop.f32.mrb[0].mxu0
        %v1158 = vadd.f32 0.0, %v1157
        %v1159 = vpop.f32.mrb[0].mxu0
        %1160 = vmatprep.mubr.bf16.mxu0 0
        %1161 = vmatmul.mubr.bf16.gmra.mrb[0].mxu0 %v1015
        %v1162 = vpop.f32.mrb[0].mxu0
        %v1163 = vadd.f32 0.0, %v1162
        %v1164 = vpop.f32.mrb[0].mxu0
        %v1165 = vpop.f32.mrb[0].mxu0
        %v1166 = vadd.f32 0.0, %v1165
        %v1167 = vpop.f32.mrb[0].mxu0
        %1168 = vdwg.mxu0
        %v1169 = vadd.f32 %v764, %v1107
        %v1170 = vadd.f32 %v765, %v1110
        %v1171 = vadd.f32 %v766, %v1115
        %v1172 = vadd.f32 %v767, %v1118
        %v1173 = vadd.f32 %v768, %v1123
        %v1174 = vadd.f32 %v769, %v1126
        %v1175 = vadd.f32 %v770, %v1131
        %v1176 = vadd.f32 %v771, %v1134
        %v1177 = vadd.f32 %v772, %v1139
        %v1178 = vadd.f32 %v773, %v1142
        %v1179 = vadd.f32 %v774, %v1147
        %v1180 = vadd.f32 %v775, %v1150
        %v1181 = vadd.f32 %v776, %v1155
        %v1182 = vadd.f32 %v777, %v1158
        %v1183 = vadd.f32 %v778, %v1163
        %v1184 = vadd.f32 %v779, %v1166
        %v1186 = vshrl.u32 %v213, 16
        %v1188 = vrot.slane %v1186, 4
        %v1189 = vshll.u32 %v213, 16
        %v1191 = vrot.slane %v1189, 5
        %v1192 = vor.u32 %v1188, %v1191
        %v1193 = vrot.slane %v1192, 4
        %v1195 = vshll.u32 %v214, 16
        %v1197 = vrot.slane %v1195, 5
        %v1198 = vsel %vm782, %v1193, %v1197
        %v1199 = vshrl.u32 %v214, 16
        %v1201 = vrot.slane %v1199, 4
        %v1202 = vor.u32 %v1201, %v1197
        %v1203 = vrot.slane %v1202, 4
        %v1205 = vshll.u32 %v215, 16
        %v1207 = vrot.slane %v1205, 5
        %v1208 = vsel %vm782, %v1203, %v1207
        %s1225 = scalar_lea.vmem %s1, 256
        %v1226 = vld [vmem:[%s1225] sm:$0xf]
        %v1227 = vld [vmem:[%s1225 + $0x4] sm:$0xf]
        %v1228 = vld [vmem:[%s1225 + $0x8] sm:$0xf]
        %v1229 = vld [vmem:[%s1225 + $0xc] sm:$0xf]
        %v1230 = vld [vmem:[%s1225 + $0x10] sm:$0xf]
        %v1231 = vld [vmem:[%s1225 + $0x14] sm:$0xf]
        %v1232 = vld [vmem:[%s1225 + $0x18] sm:$0xf]
        %v1233 = vld [vmem:[%s1225 + $0x1c] sm:$0xf]
        %v1234 = vld [vmem:[%s1225 + $0x20] sm:$0xf]
        %v1235 = vld [vmem:[%s1225 + $0x24] sm:$0xf]
        %v1236 = vld [vmem:[%s1225 + $0x28] sm:$0xf]
        %v1237 = vld [vmem:[%s1225 + $0x2c] sm:$0xf]
        %v1238 = vld [vmem:[%s1225 + $0x30] sm:$0xf]
        %v1239 = vld [vmem:[%s1225 + $0x34] sm:$0xf]
        %v1240 = vld [vmem:[%s1225 + $0x38] sm:$0xf]
        %v1241 = vld [vmem:[%s1225 + $0x3c] sm:$0xf]
        %v1242 = vunpack.c.l.b16 %v1198
        %v1243 = vunpack.c.l.b16 %v1208
        %v1244 = vpack.c.b16 %v1243, %v1242
        %v1262 = vunpack.c.l.b16 %v1226
        %v1263 = vunpack.c.l.b16 %v1227
        %v1264 = vunpack.c.l.b16 %v1228
        %v1265 = vunpack.c.l.b16 %v1229
        %v1266 = vunpack.c.l.b16 %v1230
        %v1267 = vunpack.c.l.b16 %v1231
        %v1268 = vunpack.c.l.b16 %v1232
        %v1269 = vunpack.c.l.b16 %v1233
        %v1270 = vunpack.c.l.b16 %v1234
        %v1271 = vunpack.c.l.b16 %v1235
        %v1272 = vunpack.c.l.b16 %v1236
        %v1273 = vunpack.c.l.b16 %v1237
        %v1274 = vunpack.c.l.b16 %v1238
        %v1275 = vunpack.c.l.b16 %v1239
        %v1276 = vunpack.c.l.b16 %v1240
        %v1277 = vunpack.c.l.b16 %v1241
        %v1278 = vpack.c.b16 %v1263, %v1262
        %v1279 = vpack.c.b16 %v1265, %v1264
        %v1280 = vpack.c.b16 %v1267, %v1266
        %v1281 = vpack.c.b16 %v1269, %v1268
        %v1282 = vpack.c.b16 %v1271, %v1270
        %v1283 = vpack.c.b16 %v1273, %v1272
        %v1284 = vpack.c.b16 %v1275, %v1274
        %v1285 = vpack.c.b16 %v1277, %v1276
        %1294 = vmatprep.subr.bf16.mxu0 0
        %1295 = vmatpush1.bf16.msra.mxu0 %v1278
        %1296 = vmatprep.subr.bf16.mxu0 0
        %1297 = vmatpush1.bf16.msra.mxu0 %v1279
        %1298 = vmatprep.subr.bf16.mxu0 0
        %1299 = vmatpush1.bf16.msra.mxu0 %v1280
        %1300 = vmatprep.subr.bf16.mxu0 0
        %1301 = vmatpush1.bf16.msra.mxu0 %v1281
        %1302 = vmatprep.subr.bf16.mxu0 0
        %1303 = vmatpush1.bf16.msra.mxu0 %v1282
        %1304 = vmatprep.subr.bf16.mxu0 0
        %1305 = vmatpush1.bf16.msra.mxu0 %v1283
        %1306 = vmatprep.subr.bf16.mxu0 0
        %1307 = vmatpush1.bf16.msra.mxu0 %v1284
        %1308 = vmatprep.subr.bf16.mxu0 0
        %1309 = vmatpush1.bf16.msra.mxu0 %v1285
        %1310 = vmatprep.subr.bf16.mxu0 0
        %1311 = vmatpush1.bf16.msra.mxu0 0
        %1312 = vmatprep.subr.bf16.mxu0 0
        %1313 = vmatpush1.bf16.msra.mxu0 0
        %1314 = vmatprep.subr.bf16.mxu0 0
        %1315 = vmatpush1.bf16.msra.mxu0 0
        %1316 = vmatprep.subr.bf16.mxu0 0
        %1317 = vmatpush1.bf16.msra.mxu0 0
        %1318 = vmatprep.subr.bf16.mxu0 0
        %1319 = vmatpush1.bf16.msra.mxu0 0
        %1320 = vmatprep.subr.bf16.mxu0 0
        %1321 = vmatpush1.bf16.msra.mxu0 0
        %1322 = vmatprep.subr.bf16.mxu0 0
        %1323 = vmatpush1.bf16.msra.mxu0 0
        %1324 = vmatprep.subr.bf16.mxu0 0
        %1325 = vmatpush1.bf16.msra.mxu0 0
        %1326 = vmatprep.mubr.bf16.mxu0 0
        %1327 = vmatmul.mubr.bf16.gmra.mrb[0].mxu0 %v1009
        %v1328 = vpop.f32.mrb[0].mxu0
        %v1329 = vadd.f32 0.0, %v1328
        %v1330 = vpop.f32.mrb[0].mxu0
        %v1331 = vpop.f32.mrb[0].mxu0
        %v1332 = vadd.f32 0.0, %v1331
        %v1333 = vpop.f32.mrb[0].mxu0
        %1334 = vmatprep.mubr.bf16.mxu0 0
        %1335 = vmatmul.mubr.bf16.gmra.mrb[0].mxu0 %v1010
        %v1336 = vpop.f32.mrb[0].mxu0
        %v1337 = vadd.f32 0.0, %v1336
        %v1338 = vpop.f32.mrb[0].mxu0
        %v1339 = vpop.f32.mrb[0].mxu0
        %v1340 = vadd.f32 0.0, %v1339
        %v1341 = vpop.f32.mrb[0].mxu0
        %1342 = vmatprep.mubr.bf16.mxu0 0
        %1343 = vmatmul.mubr.bf16.gmra.mrb[0].mxu0 %v1011
        %v1344 = vpop.f32.mrb[0].mxu0
        %v1345 = vadd.f32 0.0, %v1344
        %v1346 = vpop.f32.mrb[0].mxu0
        %v1347 = vpop.f32.mrb[0].mxu0
        %v1348 = vadd.f32 0.0, %v1347
        %v1349 = vpop.f32.mrb[0].mxu0
        %1350 = vmatprep.mubr.bf16.mxu0 0
        %1351 = vmatmul.mubr.bf16.gmra.mrb[0].mxu0 %v1012
        %v1352 = vpop.f32.mrb[0].mxu0
        %v1353 = vadd.f32 0.0, %v1352
        %v1354 = vpop.f32.mrb[0].mxu0
        %v1355 = vpop.f32.mrb[0].mxu0
        %v1356 = vadd.f32 0.0, %v1355
        %v1357 = vpop.f32.mrb[0].mxu0
        %1358 = vmatprep.mubr.bf16.mxu0 0
        %1359 = vmatmul.mubr.bf16.gmra.mrb[0].mxu0 %v1013
        %v1360 = vpop.f32.mrb[0].mxu0
        %v1361 = vadd.f32 0.0, %v1360
        %v1362 = vpop.f32.mrb[0].mxu0
        %v1363 = vpop.f32.mrb[0].mxu0
        %v1364 = vadd.f32 0.0, %v1363
        %v1365 = vpop.f32.mrb[0].mxu0
        %1366 = vmatprep.mubr.bf16.mxu0 0
        %1367 = vmatmul.mubr.bf16.gmra.mrb[0].mxu0 %v1014
        %v1368 = vpop.f32.mrb[0].mxu0
        %v1369 = vadd.f32 0.0, %v1368
        %v1370 = vpop.f32.mrb[0].mxu0
        %v1371 = vpop.f32.mrb[0].mxu0
        %v1372 = vadd.f32 0.0, %v1371
        %v1373 = vpop.f32.mrb[0].mxu0
        %1374 = vmatprep.mubr.bf16.mxu0 0
        %1375 = vmatmul.mubr.bf16.gmra.mrb[0].mxu0 %v1015
        %v1376 = vpop.f32.mrb[0].mxu0
        %v1377 = vadd.f32 0.0, %v1376
        %v1378 = vpop.f32.mrb[0].mxu0
        %v1379 = vpop.f32.mrb[0].mxu0
        %v1380 = vadd.f32 0.0, %v1379
        %v1381 = vpop.f32.mrb[0].mxu0
        %1382 = vmatprep.mubr.bf16.mxu0 0
        %1383 = vmatmul.mubr.bf16.gmra.mrb[0].mxu0 %v1244
        %v1384 = vpop.f32.mrb[0].mxu0
        %v1385 = vadd.f32 0.0, %v1384
        %v1386 = vpop.f32.mrb[0].mxu0
        %v1387 = vpop.f32.mrb[0].mxu0
        %v1388 = vadd.f32 0.0, %v1387
        %v1389 = vpop.f32.mrb[0].mxu0
        %1390 = vdwg.mxu0
        %v1391 = vadd.f32 %v1169, %v1329
        %v1392 = vadd.f32 %v1170, %v1332
        %v1393 = vadd.f32 %v1171, %v1337
        %v1394 = vadd.f32 %v1172, %v1340
        %v1395 = vadd.f32 %v1173, %v1345
        %v1396 = vadd.f32 %v1174, %v1348
        %v1397 = vadd.f32 %v1175, %v1353
        %v1398 = vadd.f32 %v1176, %v1356
        %v1399 = vadd.f32 %v1177, %v1361
        %v1400 = vadd.f32 %v1178, %v1364
        %v1401 = vadd.f32 %v1179, %v1369
        %v1402 = vadd.f32 %v1180, %v1372
        %v1403 = vadd.f32 %v1181, %v1377
        %v1404 = vadd.f32 %v1182, %v1380
        %v1405 = vadd.f32 %v1183, %v1385
        %v1406 = vadd.f32 %v1184, %v1388
        %v1408 = vshrl.u32 %v216, 16
        %v1410 = vrot.slane %v1408, 4
        %v1411 = vshll.u32 %v216, 16
        %v1413 = vrot.slane %v1411, 5
        %v1414 = vor.u32 %v1410, %v1413
        %v1415 = vrot.slane %v1414, 4
        %v1417 = vshll.u32 %v217, 16
        %v1419 = vrot.slane %v1417, 5
        %v1420 = vsel %vm782, %v1415, %v1419
        %v1421 = vshrl.u32 %v217, 16
        %v1423 = vrot.slane %v1421, 4
        %v1424 = vor.u32 %v1423, %v1419
        %v1425 = vrot.slane %v1424, 4
        %v1427 = vshll.u32 %v218, 16
        %v1429 = vrot.slane %v1427, 5
        %v1430 = vsel %vm782, %v1425, %v1429
        %s1431 = scalar_lea.vmem %s1, 448
        %v1432 = vld [vmem:[%s1431] sm:$0xf]
        %v1433 = vld [vmem:[%s1431 + $0x4] sm:$0xf]
        %v1434 = vld [vmem:[%s1431 + $0x8] sm:$0xf]
        %v1435 = vld [vmem:[%s1431 + $0xc] sm:$0xf]
        %v1436 = vld [vmem:[%s1431 + $0x10] sm:$0xf]
        %v1437 = vld [vmem:[%s1431 + $0x14] sm:$0xf]
        %v1438 = vld [vmem:[%s1431 + $0x18] sm:$0xf]
        %v1439 = vld [vmem:[%s1431 + $0x1c] sm:$0xf]
        %v1440 = vld [vmem:[%s1431 + $0x20] sm:$0xf]
        %v1441 = vld [vmem:[%s1431 + $0x24] sm:$0xf]
        %v1442 = vld [vmem:[%s1431 + $0x28] sm:$0xf]
        %v1443 = vld [vmem:[%s1431 + $0x2c] sm:$0xf]
        %v1444 = vld [vmem:[%s1431 + $0x30] sm:$0xf]
        %v1445 = vld [vmem:[%s1431 + $0x34] sm:$0xf]
        %v1446 = vld [vmem:[%s1431 + $0x38] sm:$0xf]
        %v1447 = vld [vmem:[%s1431 + $0x3c] sm:$0xf]
        %v1448 = vunpack.c.l.b16 %v1420
        %v1449 = vunpack.c.l.b16 %v1430
        %v1450 = vpack.c.b16 %v1449, %v1448
        %v1468 = vunpack.c.l.b16 %v1432
        %v1469 = vunpack.c.l.b16 %v1433
        %v1470 = vunpack.c.l.b16 %v1434
        %v1471 = vunpack.c.l.b16 %v1435
        %v1472 = vunpack.c.l.b16 %v1436
        %v1473 = vunpack.c.l.b16 %v1437
        %v1474 = vunpack.c.l.b16 %v1438
        %v1475 = vunpack.c.l.b16 %v1439
        %v1476 = vunpack.c.l.b16 %v1440
        %v1477 = vunpack.c.l.b16 %v1441
        %v1478 = vunpack.c.l.b16 %v1442
        %v1479 = vunpack.c.l.b16 %v1443
        %v1480 = vunpack.c.l.b16 %v1444
        %v1481 = vunpack.c.l.b16 %v1445
        %v1482 = vunpack.c.l.b16 %v1446
        %v1483 = vunpack.c.l.b16 %v1447
        %v1484 = vpack.c.b16 %v1469, %v1468
        %v1485 = vpack.c.b16 %v1471, %v1470
        %v1486 = vpack.c.b16 %v1473, %v1472
        %v1487 = vpack.c.b16 %v1475, %v1474
        %v1488 = vpack.c.b16 %v1477, %v1476
        %v1489 = vpack.c.b16 %v1479, %v1478
        %v1490 = vpack.c.b16 %v1481, %v1480
        %v1491 = vpack.c.b16 %v1483, %v1482
        %1500 = vmatprep.subr.bf16.mxu0 0
        %1501 = vmatpush1.bf16.msra.mxu0 %v1484
        %1502 = vmatprep.subr.bf16.mxu0 0
        %1503 = vmatpush1.bf16.msra.mxu0 %v1485
        %1504 = vmatprep.subr.bf16.mxu0 0
        %1505 = vmatpush1.bf16.msra.mxu0 %v1486
        %1506 = vmatprep.subr.bf16.mxu0 0
        %1507 = vmatpush1.bf16.msra.mxu0 %v1487
        %1508 = vmatprep.subr.bf16.mxu0 0
        %1509 = vmatpush1.bf16.msra.mxu0 %v1488
        %1510 = vmatprep.subr.bf16.mxu0 0
        %1511 = vmatpush1.bf16.msra.mxu0 %v1489
        %1512 = vmatprep.subr.bf16.mxu0 0
        %1513 = vmatpush1.bf16.msra.mxu0 %v1490
        %1514 = vmatprep.subr.bf16.mxu0 0
        %1515 = vmatpush1.bf16.msra.mxu0 %v1491
        %1516 = vmatprep.subr.bf16.mxu0 0
        %1517 = vmatpush1.bf16.msra.mxu0 0
        %1518 = vmatprep.subr.bf16.mxu0 0
        %1519 = vmatpush1.bf16.msra.mxu0 0
        %1520 = vmatprep.subr.bf16.mxu0 0
        %1521 = vmatpush1.bf16.msra.mxu0 0
        %1522 = vmatprep.subr.bf16.mxu0 0
        %1523 = vmatpush1.bf16.msra.mxu0 0
        %1524 = vmatprep.subr.bf16.mxu0 0
        %1525 = vmatpush1.bf16.msra.mxu0 0
        %1526 = vmatprep.subr.bf16.mxu0 0
        %1527 = vmatpush1.bf16.msra.mxu0 0
        %1528 = vmatprep.subr.bf16.mxu0 0
        %1529 = vmatpush1.bf16.msra.mxu0 0
        %1530 = vmatprep.subr.bf16.mxu0 0
        %1531 = vmatpush1.bf16.msra.mxu0 0
        %1532 = vmatprep.mubr.bf16.mxu0 0
        %1533 = vmatmul.mubr.bf16.gmra.mrb[0].mxu0 %v1010
        %v1534 = vpop.f32.mrb[0].mxu0
        %v1535 = vadd.f32 0.0, %v1534
        %v1536 = vpop.f32.mrb[0].mxu0
        %v1537 = vpop.f32.mrb[0].mxu0
        %v1538 = vadd.f32 0.0, %v1537
        %v1539 = vpop.f32.mrb[0].mxu0
        %1540 = vmatprep.mubr.bf16.mxu0 0
        %1541 = vmatmul.mubr.bf16.gmra.mrb[0].mxu0 %v1011
        %v1542 = vpop.f32.mrb[0].mxu0
        %v1543 = vadd.f32 0.0, %v1542
        %v1544 = vpop.f32.mrb[0].mxu0
        %v1545 = vpop.f32.mrb[0].mxu0
        %v1546 = vadd.f32 0.0, %v1545
        %v1547 = vpop.f32.mrb[0].mxu0
        %1548 = vmatprep.mubr.bf16.mxu0 0
        %1549 = vmatmul.mubr.bf16.gmra.mrb[0].mxu0 %v1012
        %v1550 = vpop.f32.mrb[0].mxu0
        %v1551 = vadd.f32 0.0, %v1550
        %v1552 = vpop.f32.mrb[0].mxu0
        %v1553 = vpop.f32.mrb[0].mxu0
        %v1554 = vadd.f32 0.0, %v1553
        %v1555 = vpop.f32.mrb[0].mxu0
        %1556 = vmatprep.mubr.bf16.mxu0 0
        %1557 = vmatmul.mubr.bf16.gmra.mrb[0].mxu0 %v1013
        %v1558 = vpop.f32.mrb[0].mxu0
        %v1559 = vadd.f32 0.0, %v1558
        %v1560 = vpop.f32.mrb[0].mxu0
        %v1561 = vpop.f32.mrb[0].mxu0
        %v1562 = vadd.f32 0.0, %v1561
        %v1563 = vpop.f32.mrb[0].mxu0
        %1564 = vmatprep.mubr.bf16.mxu0 0
        %1565 = vmatmul.mubr.bf16.gmra.mrb[0].mxu0 %v1014
        %v1566 = vpop.f32.mrb[0].mxu0
        %v1567 = vadd.f32 0.0, %v1566
        %v1568 = vpop.f32.mrb[0].mxu0
        %v1569 = vpop.f32.mrb[0].mxu0
        %v1570 = vadd.f32 0.0, %v1569
        %v1571 = vpop.f32.mrb[0].mxu0
        %1572 = vmatprep.mubr.bf16.mxu0 0
        %1573 = vmatmul.mubr.bf16.gmra.mrb[0].mxu0 %v1015
        %v1574 = vpop.f32.mrb[0].mxu0
        %v1575 = vadd.f32 0.0, %v1574
        %v1576 = vpop.f32.mrb[0].mxu0
        %v1577 = vpop.f32.mrb[0].mxu0
        %v1578 = vadd.f32 0.0, %v1577
        %v1579 = vpop.f32.mrb[0].mxu0
        %1580 = vmatprep.mubr.bf16.mxu0 0
        %1581 = vmatmul.mubr.bf16.gmra.mrb[0].mxu0 %v1244
        %v1582 = vpop.f32.mrb[0].mxu0
        %v1583 = vadd.f32 0.0, %v1582
        %v1584 = vpop.f32.mrb[0].mxu0
        %v1585 = vpop.f32.mrb[0].mxu0
        %v1586 = vadd.f32 0.0, %v1585
        %v1587 = vpop.f32.mrb[0].mxu0
        %1588 = vmatprep.mubr.bf16.mxu0 0
        %1589 = vmatmul.mubr.bf16.gmra.mrb[0].mxu0 %v1450
        %v1590 = vpop.f32.mrb[0].mxu0
        %v1591 = vadd.f32 0.0, %v1590
        %v1592 = vpop.f32.mrb[0].mxu0
        %v1593 = vpop.f32.mrb[0].mxu0
        %v1594 = vadd.f32 0.0, %v1593
        %v1595 = vpop.f32.mrb[0].mxu0
        %1596 = vdwg.mxu0
        %v1597 = vadd.f32 %v1391, %v1535
        %v1598 = vadd.f32 %v1392, %v1538
        %v1599 = vadd.f32 %v1393, %v1543
        %v1600 = vadd.f32 %v1394, %v1546
        %v1601 = vadd.f32 %v1395, %v1551
        %v1602 = vadd.f32 %v1396, %v1554
        %v1603 = vadd.f32 %v1397, %v1559
        %v1604 = vadd.f32 %v1398, %v1562
        %v1605 = vadd.f32 %v1399, %v1567
        %v1606 = vadd.f32 %v1400, %v1570
        %v1607 = vadd.f32 %v1401, %v1575
        %v1608 = vadd.f32 %v1402, %v1578
        %v1609 = vadd.f32 %v1403, %v1583
        %v1610 = vadd.f32 %v1404, %v1586
        %v1611 = vadd.f32 %v1405, %v1591
        %v1612 = vadd.f32 %v1406, %v1594
        %vm1621 = vcmask 1042432
        %vm1622 = vcmask 1046532
        %vm1623 = vmor %vm1621, %vm1622
        %v1624 = vrot.slane %v189, 5
        %v1625 = vrot.slane %v1624, 4
        %v1626 = vrot.slane %v190, 5
        %v1627 = vsel %vm1623, %v1625, %v1626
        %v1628 = vrot.slane %v1626, 4
        %v1629 = vrot.slane %v191, 5
        %v1630 = vsel %vm1623, %v1628, %v1629
        %v1631 = vrot.slane %v192, 5
        %v1632 = vrot.slane %v1631, 4
        %v1633 = vrot.slane %v193, 5
        %v1634 = vsel %vm1623, %v1632, %v1633
        %v1635 = vrot.slane %v1633, 4
        %v1636 = vrot.slane %v194, 5
        %v1637 = vsel %vm1623, %v1635, %v1636
        %v1638 = vrot.slane %v195, 5
        %v1639 = vrot.slane %v1638, 4
        %v1640 = vrot.slane %v196, 5
        %v1641 = vsel %vm1623, %v1639, %v1640
        %v1642 = vrot.slane %v1640, 4
        %v1643 = vrot.slane %v197, 5
        %v1644 = vsel %vm1623, %v1642, %v1643
        %v1645 = vrot.slane %v198, 5
        %v1646 = vrot.slane %v1645, 4
        %v1647 = vrot.slane %v199, 5
        %v1648 = vsel %vm1623, %v1646, %v1647
        %v1649 = vrot.slane %v1647, 4
        %v1650 = vrot.slane %v200, 5
        %v1651 = vsel %vm1623, %v1649, %v1650
        %v1652 = vrot.slane %v201, 5
        %v1653 = vrot.slane %v1652, 4
        %v1654 = vrot.slane %v202, 5
        %v1655 = vsel %vm1623, %v1653, %v1654
        %v1656 = vrot.slane %v1654, 4
        %v1657 = vrot.slane %v203, 5
        %v1658 = vsel %vm1623, %v1656, %v1657
        %v1659 = vrot.slane %v204, 5
        %v1660 = vrot.slane %v1659, 4
        %v1661 = vrot.slane %v205, 5
        %v1662 = vsel %vm1623, %v1660, %v1661
        %v1663 = vrot.slane %v1661, 4
        %v1664 = vrot.slane %v206, 5
        %v1665 = vsel %vm1623, %v1663, %v1664
        %v1666 = vrot.slane %v207, 5
        %v1667 = vrot.slane %v1666, 4
        %v1668 = vrot.slane %v208, 5
        %v1669 = vsel %vm1623, %v1667, %v1668
        %v1670 = vrot.slane %v1668, 4
        %v1671 = vrot.slane %v209, 5
        %v1672 = vsel %vm1623, %v1670, %v1671
        %v1673 = vrot.slane %v210, 5
        %v1674 = vrot.slane %v1673, 4
        %v1675 = vrot.slane %v211, 5
        %v1676 = vsel %vm1623, %v1674, %v1675
        %v1677 = vrot.slane %v1675, 4
        %v1678 = vrot.slane %v212, 5
        %v1679 = vsel %vm1623, %v1677, %v1678
        %s1680 = scalar_lea.vmem %s1, 128
        %v1681 = vld [vmem:[%s1680] sm:$0xf]
        %v1682 = vld [vmem:[%s1680 + $0x4] sm:$0xf]
        %v1683 = vld [vmem:[%s1680 + $0x8] sm:$0xf]
        %v1684 = vld [vmem:[%s1680 + $0xc] sm:$0xf]
        %v1685 = vld [vmem:[%s1680 + $0x10] sm:$0xf]
        %v1686 = vld [vmem:[%s1680 + $0x14] sm:$0xf]
        %v1687 = vld [vmem:[%s1680 + $0x18] sm:$0xf]
        %v1688 = vld [vmem:[%s1680 + $0x1c] sm:$0xf]
        %v1689 = vld [vmem:[%s1680 + $0x20] sm:$0xf]
        %v1690 = vld [vmem:[%s1680 + $0x24] sm:$0xf]
        %v1691 = vld [vmem:[%s1680 + $0x28] sm:$0xf]
        %v1692 = vld [vmem:[%s1680 + $0x2c] sm:$0xf]
        %v1693 = vld [vmem:[%s1680 + $0x30] sm:$0xf]
        %v1694 = vld [vmem:[%s1680 + $0x34] sm:$0xf]
        %v1695 = vld [vmem:[%s1680 + $0x38] sm:$0xf]
        %v1696 = vld [vmem:[%s1680 + $0x3c] sm:$0xf]
        %v1697 = vunpack.c.l.b16 %v1627
        %v1698 = vunpack.c.l.b16 %v1630
        %v1699 = vunpack.c.l.b16 %v1634
        %v1700 = vunpack.c.l.b16 %v1637
        %v1701 = vunpack.c.l.b16 %v1641
        %v1702 = vunpack.c.l.b16 %v1644
        %v1703 = vunpack.c.l.b16 %v1648
        %v1704 = vunpack.c.l.b16 %v1651
        %v1705 = vunpack.c.l.b16 %v1655
        %v1706 = vunpack.c.l.b16 %v1658
        %v1707 = vunpack.c.l.b16 %v1662
        %v1708 = vunpack.c.l.b16 %v1665
        %v1709 = vunpack.c.l.b16 %v1669
        %v1710 = vunpack.c.l.b16 %v1672
        %v1711 = vunpack.c.l.b16 %v1676
        %v1712 = vunpack.c.l.b16 %v1679
        %v1713 = vpack.c.b16 %v1698, %v1697
        %v1714 = vpack.c.b16 %v1700, %v1699
        %v1715 = vpack.c.b16 %v1702, %v1701
        %v1716 = vpack.c.b16 %v1704, %v1703
        %v1717 = vpack.c.b16 %v1706, %v1705
        %v1718 = vpack.c.b16 %v1708, %v1707
        %v1719 = vpack.c.b16 %v1710, %v1709
        %v1720 = vpack.c.b16 %v1712, %v1711
        %v1745 = vunpack.c.l.b16 %v1681
        %v1746 = vunpack.c.l.b16 %v1682
        %v1747 = vunpack.c.l.b16 %v1683
        %v1748 = vunpack.c.l.b16 %v1684
        %v1749 = vunpack.c.l.b16 %v1685
        %v1750 = vunpack.c.l.b16 %v1686
        %v1751 = vunpack.c.l.b16 %v1687
        %v1752 = vunpack.c.l.b16 %v1688
        %v1753 = vunpack.c.l.b16 %v1689
        %v1754 = vunpack.c.l.b16 %v1690
        %v1755 = vunpack.c.l.b16 %v1691
        %v1756 = vunpack.c.l.b16 %v1692
        %v1757 = vunpack.c.l.b16 %v1693
        %v1758 = vunpack.c.l.b16 %v1694
        %v1759 = vunpack.c.l.b16 %v1695
        %v1760 = vunpack.c.l.b16 %v1696
        %v1761 = vpack.c.b16 %v1746, %v1745
        %v1762 = vpack.c.b16 %v1748, %v1747
        %v1763 = vpack.c.b16 %v1750, %v1749
        %v1764 = vpack.c.b16 %v1752, %v1751
        %v1765 = vpack.c.b16 %v1754, %v1753
        %v1766 = vpack.c.b16 %v1756, %v1755
        %v1767 = vpack.c.b16 %v1758, %v1757
        %v1768 = vpack.c.b16 %v1760, %v1759
        %1777 = vmatprep.subr.bf16.mxu0 0
        %1778 = vmatpush1.bf16.msra.mxu0 %v1761
        %1779 = vmatprep.subr.bf16.mxu0 0
        %1780 = vmatpush1.bf16.msra.mxu0 %v1762
        %1781 = vmatprep.subr.bf16.mxu0 0
        %1782 = vmatpush1.bf16.msra.mxu0 %v1763
        %1783 = vmatprep.subr.bf16.mxu0 0
        %1784 = vmatpush1.bf16.msra.mxu0 %v1764
        %1785 = vmatprep.subr.bf16.mxu0 0
        %1786 = vmatpush1.bf16.msra.mxu0 %v1765
        %1787 = vmatprep.subr.bf16.mxu0 0
        %1788 = vmatpush1.bf16.msra.mxu0 %v1766
        %1789 = vmatprep.subr.bf16.mxu0 0
        %1790 = vmatpush1.bf16.msra.mxu0 %v1767
        %1791 = vmatprep.subr.bf16.mxu0 0
        %1792 = vmatpush1.bf16.msra.mxu0 %v1768
        %1793 = vmatprep.subr.bf16.mxu0 0
        %1794 = vmatpush1.bf16.msra.mxu0 0
        %1795 = vmatprep.subr.bf16.mxu0 0
        %1796 = vmatpush1.bf16.msra.mxu0 0
        %1797 = vmatprep.subr.bf16.mxu0 0
        %1798 = vmatpush1.bf16.msra.mxu0 0
        %1799 = vmatprep.subr.bf16.mxu0 0
        %1800 = vmatpush1.bf16.msra.mxu0 0
        %1801 = vmatprep.subr.bf16.mxu0 0
        %1802 = vmatpush1.bf16.msra.mxu0 0
        %1803 = vmatprep.subr.bf16.mxu0 0
        %1804 = vmatpush1.bf16.msra.mxu0 0
        %1805 = vmatprep.subr.bf16.mxu0 0
        %1806 = vmatpush1.bf16.msra.mxu0 0
        %1807 = vmatprep.subr.bf16.mxu0 0
        %1808 = vmatpush1.bf16.msra.mxu0 0
        %1809 = vmatprep.mubr.bf16.mxu0 0
        %1810 = vmatmul.mubr.bf16.gmra.mrb[0].mxu0 %v1713
        %v1811 = vpop.f32.mrb[0].mxu0
        %v1812 = vadd.f32 0.0, %v1811
        %v1813 = vpop.f32.mrb[0].mxu0
        %v1814 = vpop.f32.mrb[0].mxu0
        %v1815 = vadd.f32 0.0, %v1814
        %v1816 = vpop.f32.mrb[0].mxu0
        %1817 = vmatprep.mubr.bf16.mxu0 0
        %1818 = vmatmul.mubr.bf16.gmra.mrb[0].mxu0 %v1714
        %v1819 = vpop.f32.mrb[0].mxu0
        %v1820 = vadd.f32 0.0, %v1819
        %v1821 = vpop.f32.mrb[0].mxu0
        %v1822 = vpop.f32.mrb[0].mxu0
        %v1823 = vadd.f32 0.0, %v1822
        %v1824 = vpop.f32.mrb[0].mxu0
        %1825 = vmatprep.mubr.bf16.mxu0 0
        %1826 = vmatmul.mubr.bf16.gmra.mrb[0].mxu0 %v1715
        %v1827 = vpop.f32.mrb[0].mxu0
        %v1828 = vadd.f32 0.0, %v1827
        %v1829 = vpop.f32.mrb[0].mxu0
        %v1830 = vpop.f32.mrb[0].mxu0
        %v1831 = vadd.f32 0.0, %v1830
        %v1832 = vpop.f32.mrb[0].mxu0
        %1833 = vmatprep.mubr.bf16.mxu0 0
        %1834 = vmatmul.mubr.bf16.gmra.mrb[0].mxu0 %v1716
        %v1835 = vpop.f32.mrb[0].mxu0
        %v1836 = vadd.f32 0.0, %v1835
        %v1837 = vpop.f32.mrb[0].mxu0
        %v1838 = vpop.f32.mrb[0].mxu0
        %v1839 = vadd.f32 0.0, %v1838
        %v1840 = vpop.f32.mrb[0].mxu0
        %1841 = vmatprep.mubr.bf16.mxu0 0
        %1842 = vmatmul.mubr.bf16.gmra.mrb[0].mxu0 %v1717
        %v1843 = vpop.f32.mrb[0].mxu0
        %v1844 = vadd.f32 0.0, %v1843
        %v1845 = vpop.f32.mrb[0].mxu0
        %v1846 = vpop.f32.mrb[0].mxu0
        %v1847 = vadd.f32 0.0, %v1846
        %v1848 = vpop.f32.mrb[0].mxu0
        %1849 = vmatprep.mubr.bf16.mxu0 0
        %1850 = vmatmul.mubr.bf16.gmra.mrb[0].mxu0 %v1718
        %v1851 = vpop.f32.mrb[0].mxu0
        %v1852 = vadd.f32 0.0, %v1851
        %v1853 = vpop.f32.mrb[0].mxu0
        %v1854 = vpop.f32.mrb[0].mxu0
        %v1855 = vadd.f32 0.0, %v1854
        %v1856 = vpop.f32.mrb[0].mxu0
        %1857 = vmatprep.mubr.bf16.mxu0 0
        %1858 = vmatmul.mubr.bf16.gmra.mrb[0].mxu0 %v1719
        %v1859 = vpop.f32.mrb[0].mxu0
        %v1860 = vadd.f32 0.0, %v1859
        %v1861 = vpop.f32.mrb[0].mxu0
        %v1862 = vpop.f32.mrb[0].mxu0
        %v1863 = vadd.f32 0.0, %v1862
        %v1864 = vpop.f32.mrb[0].mxu0
        %1865 = vmatprep.mubr.bf16.mxu0 0
        %1866 = vmatmul.mubr.bf16.gmra.mrb[0].mxu0 %v1720
        %v1867 = vpop.f32.mrb[0].mxu0
        %v1868 = vadd.f32 0.0, %v1867
        %v1869 = vpop.f32.mrb[0].mxu0
        %v1870 = vpop.f32.mrb[0].mxu0
        %v1871 = vadd.f32 0.0, %v1870
        %v1872 = vpop.f32.mrb[0].mxu0
        %1873 = vdwg.mxu0
        %v1874 = vadd.f32 %v1597, %v1812
        %v1875 = vadd.f32 %v1598, %v1815
        %v1876 = vadd.f32 %v1599, %v1820
        %v1877 = vadd.f32 %v1600, %v1823
        %v1878 = vadd.f32 %v1601, %v1828
        %v1879 = vadd.f32 %v1602, %v1831
        %v1880 = vadd.f32 %v1603, %v1836
        %v1881 = vadd.f32 %v1604, %v1839
        %v1882 = vadd.f32 %v1605, %v1844
        %v1883 = vadd.f32 %v1606, %v1847
        %v1884 = vadd.f32 %v1607, %v1852
        %v1885 = vadd.f32 %v1608, %v1855
        %v1886 = vadd.f32 %v1609, %v1860
        %v1887 = vadd.f32 %v1610, %v1863
        %v1888 = vadd.f32 %v1611, %v1868
        %v1889 = vadd.f32 %v1612, %v1871
        %v1891 = vrot.slane %v213, 5
        %v1892 = vrot.slane %v1891, 4
        %v1893 = vrot.slane %v214, 5
        %v1894 = vsel %vm1623, %v1892, %v1893
        %v1895 = vrot.slane %v1893, 4
        %v1896 = vrot.slane %v215, 5
        %v1897 = vsel %vm1623, %v1895, %v1896
        %s1898 = scalar_lea.vmem %s1, 320
        %v1899 = vld [vmem:[%s1898] sm:$0xf]
        %v1900 = vld [vmem:[%s1898 + $0x4] sm:$0xf]
        %v1901 = vld [vmem:[%s1898 + $0x8] sm:$0xf]
        %v1902 = vld [vmem:[%s1898 + $0xc] sm:$0xf]
        %v1903 = vld [vmem:[%s1898 + $0x10] sm:$0xf]
        %v1904 = vld [vmem:[%s1898 + $0x14] sm:$0xf]
        %v1905 = vld [vmem:[%s1898 + $0x18] sm:$0xf]
        %v1906 = vld [vmem:[%s1898 + $0x1c] sm:$0xf]
        %v1907 = vld [vmem:[%s1898 + $0x20] sm:$0xf]
        %v1908 = vld [vmem:[%s1898 + $0x24] sm:$0xf]
        %v1909 = vld [vmem:[%s1898 + $0x28] sm:$0xf]
        %v1910 = vld [vmem:[%s1898 + $0x2c] sm:$0xf]
        %v1911 = vld [vmem:[%s1898 + $0x30] sm:$0xf]
        %v1912 = vld [vmem:[%s1898 + $0x34] sm:$0xf]
        %v1913 = vld [vmem:[%s1898 + $0x38] sm:$0xf]
        %v1914 = vld [vmem:[%s1898 + $0x3c] sm:$0xf]
        %v1915 = vunpack.c.l.b16 %v1894
        %v1916 = vunpack.c.l.b16 %v1897
        %v1917 = vpack.c.b16 %v1916, %v1915
        %v1935 = vunpack.c.l.b16 %v1899
        %v1936 = vunpack.c.l.b16 %v1900
        %v1937 = vunpack.c.l.b16 %v1901
        %v1938 = vunpack.c.l.b16 %v1902
        %v1939 = vunpack.c.l.b16 %v1903
        %v1940 = vunpack.c.l.b16 %v1904
        %v1941 = vunpack.c.l.b16 %v1905
        %v1942 = vunpack.c.l.b16 %v1906
        %v1943 = vunpack.c.l.b16 %v1907
        %v1944 = vunpack.c.l.b16 %v1908
        %v1945 = vunpack.c.l.b16 %v1909
        %v1946 = vunpack.c.l.b16 %v1910
        %v1947 = vunpack.c.l.b16 %v1911
        %v1948 = vunpack.c.l.b16 %v1912
        %v1949 = vunpack.c.l.b16 %v1913
        %v1950 = vunpack.c.l.b16 %v1914
        %v1951 = vpack.c.b16 %v1936, %v1935
        %v1952 = vpack.c.b16 %v1938, %v1937
        %v1953 = vpack.c.b16 %v1940, %v1939
        %v1954 = vpack.c.b16 %v1942, %v1941
        %v1955 = vpack.c.b16 %v1944, %v1943
        %v1956 = vpack.c.b16 %v1946, %v1945
        %v1957 = vpack.c.b16 %v1948, %v1947
        %v1958 = vpack.c.b16 %v1950, %v1949
        %1967 = vmatprep.subr.bf16.mxu0 0
        %1968 = vmatpush1.bf16.msra.mxu0 %v1951
        %1969 = vmatprep.subr.bf16.mxu0 0
        %1970 = vmatpush1.bf16.msra.mxu0 %v1952
        %1971 = vmatprep.subr.bf16.mxu0 0
        %1972 = vmatpush1.bf16.msra.mxu0 %v1953
        %1973 = vmatprep.subr.bf16.mxu0 0
        %1974 = vmatpush1.bf16.msra.mxu0 %v1954
        %1975 = vmatprep.subr.bf16.mxu0 0
        %1976 = vmatpush1.bf16.msra.mxu0 %v1955
        %1977 = vmatprep.subr.bf16.mxu0 0
        %1978 = vmatpush1.bf16.msra.mxu0 %v1956
        %1979 = vmatprep.subr.bf16.mxu0 0
        %1980 = vmatpush1.bf16.msra.mxu0 %v1957
        %1981 = vmatprep.subr.bf16.mxu0 0
        %1982 = vmatpush1.bf16.msra.mxu0 %v1958
        %1983 = vmatprep.subr.bf16.mxu0 0
        %1984 = vmatpush1.bf16.msra.mxu0 0
        %1985 = vmatprep.subr.bf16.mxu0 0
        %1986 = vmatpush1.bf16.msra.mxu0 0
        %1987 = vmatprep.subr.bf16.mxu0 0
        %1988 = vmatpush1.bf16.msra.mxu0 0
        %1989 = vmatprep.subr.bf16.mxu0 0
        %1990 = vmatpush1.bf16.msra.mxu0 0
        %1991 = vmatprep.subr.bf16.mxu0 0
        %1992 = vmatpush1.bf16.msra.mxu0 0
        %1993 = vmatprep.subr.bf16.mxu0 0
        %1994 = vmatpush1.bf16.msra.mxu0 0
        %1995 = vmatprep.subr.bf16.mxu0 0
        %1996 = vmatpush1.bf16.msra.mxu0 0
        %1997 = vmatprep.subr.bf16.mxu0 0
        %1998 = vmatpush1.bf16.msra.mxu0 0
        %1999 = vmatprep.mubr.bf16.mxu0 0
        %2000 = vmatmul.mubr.bf16.gmra.mrb[0].mxu0 %v1714
        %v2001 = vpop.f32.mrb[0].mxu0
        %v2002 = vadd.f32 0.0, %v2001
        %v2003 = vpop.f32.mrb[0].mxu0
        %v2004 = vpop.f32.mrb[0].mxu0
        %v2005 = vadd.f32 0.0, %v2004
        %v2006 = vpop.f32.mrb[0].mxu0
        %2007 = vmatprep.mubr.bf16.mxu0 0
        %2008 = vmatmul.mubr.bf16.gmra.mrb[0].mxu0 %v1715
        %v2009 = vpop.f32.mrb[0].mxu0
        %v2010 = vadd.f32 0.0, %v2009
        %v2011 = vpop.f32.mrb[0].mxu0
        %v2012 = vpop.f32.mrb[0].mxu0
        %v2013 = vadd.f32 0.0, %v2012
        %v2014 = vpop.f32.mrb[0].mxu0
        %2015 = vmatprep.mubr.bf16.mxu0 0
        %2016 = vmatmul.mubr.bf16.gmra.mrb[0].mxu0 %v1716
        %v2017 = vpop.f32.mrb[0].mxu0
        %v2018 = vadd.f32 0.0, %v2017
        %v2019 = vpop.f32.mrb[0].mxu0
        %v2020 = vpop.f32.mrb[0].mxu0
        %v2021 = vadd.f32 0.0, %v2020
        %v2022 = vpop.f32.mrb[0].mxu0
        %2023 = vmatprep.mubr.bf16.mxu0 0
        %2024 = vmatmul.mubr.bf16.gmra.mrb[0].mxu0 %v1717
        %v2025 = vpop.f32.mrb[0].mxu0
        %v2026 = vadd.f32 0.0, %v2025
        %v2027 = vpop.f32.mrb[0].mxu0
        %v2028 = vpop.f32.mrb[0].mxu0
        %v2029 = vadd.f32 0.0, %v2028
        %v2030 = vpop.f32.mrb[0].mxu0
        %2031 = vmatprep.mubr.bf16.mxu0 0
        %2032 = vmatmul.mubr.bf16.gmra.mrb[0].mxu0 %v1718
        %v2033 = vpop.f32.mrb[0].mxu0
        %v2034 = vadd.f32 0.0, %v2033
        %v2035 = vpop.f32.mrb[0].mxu0
        %v2036 = vpop.f32.mrb[0].mxu0
        %v2037 = vadd.f32 0.0, %v2036
        %v2038 = vpop.f32.mrb[0].mxu0
        %2039 = vmatprep.mubr.bf16.mxu0 0
        %2040 = vmatmul.mubr.bf16.gmra.mrb[0].mxu0 %v1719
        %v2041 = vpop.f32.mrb[0].mxu0
        %v2042 = vadd.f32 0.0, %v2041
        %v2043 = vpop.f32.mrb[0].mxu0
        %v2044 = vpop.f32.mrb[0].mxu0
        %v2045 = vadd.f32 0.0, %v2044
        %v2046 = vpop.f32.mrb[0].mxu0
        %2047 = vmatprep.mubr.bf16.mxu0 0
        %2048 = vmatmul.mubr.bf16.gmra.mrb[0].mxu0 %v1720
        %v2049 = vpop.f32.mrb[0].mxu0
        %v2050 = vadd.f32 0.0, %v2049
        %v2051 = vpop.f32.mrb[0].mxu0
        %v2052 = vpop.f32.mrb[0].mxu0
        %v2053 = vadd.f32 0.0, %v2052
        %v2054 = vpop.f32.mrb[0].mxu0
        %2055 = vmatprep.mubr.bf16.mxu0 0
        %2056 = vmatmul.mubr.bf16.gmra.mrb[0].mxu0 %v1917
        %v2057 = vpop.f32.mrb[0].mxu0
        %v2058 = vadd.f32 0.0, %v2057
        %v2059 = vpop.f32.mrb[0].mxu0
        %v2060 = vpop.f32.mrb[0].mxu0
        %v2061 = vadd.f32 0.0, %v2060
        %v2062 = vpop.f32.mrb[0].mxu0
        %2063 = vdwg.mxu0
        %v2064 = vadd.f32 %v1874, %v2002
        %v2065 = vadd.f32 %v1875, %v2005
        %v2066 = vadd.f32 %v1876, %v2010
        %v2067 = vadd.f32 %v1877, %v2013
        %v2068 = vadd.f32 %v1878, %v2018
        %v2069 = vadd.f32 %v1879, %v2021
        %v2070 = vadd.f32 %v1880, %v2026
        %v2071 = vadd.f32 %v1881, %v2029
        %v2072 = vadd.f32 %v1882, %v2034
        %v2073 = vadd.f32 %v1883, %v2037
        %v2074 = vadd.f32 %v1884, %v2042
        %v2075 = vadd.f32 %v1885, %v2045
        %v2076 = vadd.f32 %v1886, %v2050
        %v2077 = vadd.f32 %v1887, %v2053
        %v2078 = vadd.f32 %v1888, %v2058
        %v2079 = vadd.f32 %v1889, %v2061
        %v2081 = vrot.slane %v216, 5
        %v2082 = vrot.slane %v2081, 4
        %v2083 = vrot.slane %v217, 5
        %v2084 = vsel %vm1623, %v2082, %v2083
        %v2085 = vrot.slane %v2083, 4
        %v2086 = vrot.slane %v218, 5
        %v2087 = vsel %vm1623, %v2085, %v2086
        %s2088 = scalar_lea.vmem %s1, 512
        %v2089 = vld [vmem:[%s2088] sm:$0xf]
        %v2090 = vld [vmem:[%s2088 + $0x4] sm:$0xf]
        %v2091 = vld [vmem:[%s2088 + $0x8] sm:$0xf]
        %v2092 = vld [vmem:[%s2088 + $0xc] sm:$0xf]
        %v2093 = vld [vmem:[%s2088 + $0x10] sm:$0xf]
        %v2094 = vld [vmem:[%s2088 + $0x14] sm:$0xf]
        %v2095 = vld [vmem:[%s2088 + $0x18] sm:$0xf]
        %v2096 = vld [vmem:[%s2088 + $0x1c] sm:$0xf]
        %v2097 = vld [vmem:[%s2088 + $0x20] sm:$0xf]
        %v2098 = vld [vmem:[%s2088 + $0x24] sm:$0xf]
        %v2099 = vld [vmem:[%s2088 + $0x28] sm:$0xf]
        %v2100 = vld [vmem:[%s2088 + $0x2c] sm:$0xf]
        %v2101 = vld [vmem:[%s2088 + $0x30] sm:$0xf]
        %v2102 = vld [vmem:[%s2088 + $0x34] sm:$0xf]
        %v2103 = vld [vmem:[%s2088 + $0x38] sm:$0xf]
        %v2104 = vld [vmem:[%s2088 + $0x3c] sm:$0xf]
        %v2105 = vunpack.c.l.b16 %v2084
        %v2106 = vunpack.c.l.b16 %v2087
        %v2107 = vpack.c.b16 %v2106, %v2105
        %v2125 = vunpack.c.l.b16 %v2089
        %v2126 = vunpack.c.l.b16 %v2090
        %v2127 = vunpack.c.l.b16 %v2091
        %v2128 = vunpack.c.l.b16 %v2092
        %v2129 = vunpack.c.l.b16 %v2093
        %v2130 = vunpack.c.l.b16 %v2094
        %v2131 = vunpack.c.l.b16 %v2095
        %v2132 = vunpack.c.l.b16 %v2096
        %v2133 = vunpack.c.l.b16 %v2097
        %v2134 = vunpack.c.l.b16 %v2098
        %v2135 = vunpack.c.l.b16 %v2099
        %v2136 = vunpack.c.l.b16 %v2100
        %v2137 = vunpack.c.l.b16 %v2101
        %v2138 = vunpack.c.l.b16 %v2102
        %v2139 = vunpack.c.l.b16 %v2103
        %v2140 = vunpack.c.l.b16 %v2104
        %v2141 = vpack.c.b16 %v2126, %v2125
        %v2142 = vpack.c.b16 %v2128, %v2127
        %v2143 = vpack.c.b16 %v2130, %v2129
        %v2144 = vpack.c.b16 %v2132, %v2131
        %v2145 = vpack.c.b16 %v2134, %v2133
        %v2146 = vpack.c.b16 %v2136, %v2135
        %v2147 = vpack.c.b16 %v2138, %v2137
        %v2148 = vpack.c.b16 %v2140, %v2139
        %2157 = vmatprep.subr.bf16.mxu0 0
        %2158 = vmatpush1.bf16.msra.mxu0 %v2141
        %2159 = vmatprep.subr.bf16.mxu0 0
        %2160 = vmatpush1.bf16.msra.mxu0 %v2142
        %2161 = vmatprep.subr.bf16.mxu0 0
        %2162 = vmatpush1.bf16.msra.mxu0 %v2143
        %2163 = vmatprep.subr.bf16.mxu0 0
        %2164 = vmatpush1.bf16.msra.mxu0 %v2144
        %2165 = vmatprep.subr.bf16.mxu0 0
        %2166 = vmatpush1.bf16.msra.mxu0 %v2145
        %2167 = vmatprep.subr.bf16.mxu0 0
        %2168 = vmatpush1.bf16.msra.mxu0 %v2146
        %2169 = vmatprep.subr.bf16.mxu0 0
        %2170 = vmatpush1.bf16.msra.mxu0 %v2147
        %2171 = vmatprep.subr.bf16.mxu0 0
        %2172 = vmatpush1.bf16.msra.mxu0 %v2148
        %2173 = vmatprep.subr.bf16.mxu0 0
        %2174 = vmatpush1.bf16.msra.mxu0 0
        %2175 = vmatprep.subr.bf16.mxu0 0
        %2176 = vmatpush1.bf16.msra.mxu0 0
        %2177 = vmatprep.subr.bf16.mxu0 0
        %2178 = vmatpush1.bf16.msra.mxu0 0
        %2179 = vmatprep.subr.bf16.mxu0 0
        %2180 = vmatpush1.bf16.msra.mxu0 0
        %2181 = vmatprep.subr.bf16.mxu0 0
        %2182 = vmatpush1.bf16.msra.mxu0 0
        %2183 = vmatprep.subr.bf16.mxu0 0
        %2184 = vmatpush1.bf16.msra.mxu0 0
        %2185 = vmatprep.subr.bf16.mxu0 0
        %2186 = vmatpush1.bf16.msra.mxu0 0
        %2187 = vmatprep.subr.bf16.mxu0 0
        %2188 = vmatpush1.bf16.msra.mxu0 0
        %2189 = vmatprep.mubr.bf16.mxu0 0
        %2190 = vmatmul.mubr.bf16.gmra.mrb[0].mxu0 %v1715
        %v2191 = vpop.f32.mrb[0].mxu0
        %v2192 = vadd.f32 0.0, %v2191
        %v2193 = vpop.f32.mrb[0].mxu0
        %v2194 = vpop.f32.mrb[0].mxu0
        %v2195 = vadd.f32 0.0, %v2194
        %v2196 = vpop.f32.mrb[0].mxu0
        %2197 = vmatprep.mubr.bf16.mxu0 0
        %2198 = vmatmul.mubr.bf16.gmra.mrb[0].mxu0 %v1716
        %v2199 = vpop.f32.mrb[0].mxu0
        %v2200 = vadd.f32 0.0, %v2199
        %v2201 = vpop.f32.mrb[0].mxu0
        %v2202 = vpop.f32.mrb[0].mxu0
        %v2203 = vadd.f32 0.0, %v2202
        %v2204 = vpop.f32.mrb[0].mxu0
        %2205 = vmatprep.mubr.bf16.mxu0 0
        %2206 = vmatmul.mubr.bf16.gmra.mrb[0].mxu0 %v1717
        %v2207 = vpop.f32.mrb[0].mxu0
        %v2208 = vadd.f32 0.0, %v2207
        %v2209 = vpop.f32.mrb[0].mxu0
        %v2210 = vpop.f32.mrb[0].mxu0
        %v2211 = vadd.f32 0.0, %v2210
        %v2212 = vpop.f32.mrb[0].mxu0
        %2213 = vmatprep.mubr.bf16.mxu0 0
        %2214 = vmatmul.mubr.bf16.gmra.mrb[0].mxu0 %v1718
        %v2215 = vpop.f32.mrb[0].mxu0
        %v2216 = vadd.f32 0.0, %v2215
        %v2217 = vpop.f32.mrb[0].mxu0
        %v2218 = vpop.f32.mrb[0].mxu0
        %v2219 = vadd.f32 0.0, %v2218
        %v2220 = vpop.f32.mrb[0].mxu0
        %2221 = vmatprep.mubr.bf16.mxu0 0
        %2222 = vmatmul.mubr.bf16.gmra.mrb[0].mxu0 %v1719
        %v2223 = vpop.f32.mrb[0].mxu0
        %v2224 = vadd.f32 0.0, %v2223
        %v2225 = vpop.f32.mrb[0].mxu0
        %v2226 = vpop.f32.mrb[0].mxu0
        %v2227 = vadd.f32 0.0, %v2226
        %v2228 = vpop.f32.mrb[0].mxu0
        %2229 = vmatprep.mubr.bf16.mxu0 0
        %2230 = vmatmul.mubr.bf16.gmra.mrb[0].mxu0 %v1720
        %v2231 = vpop.f32.mrb[0].mxu0
        %v2232 = vadd.f32 0.0, %v2231
        %v2233 = vpop.f32.mrb[0].mxu0
        %v2234 = vpop.f32.mrb[0].mxu0
        %v2235 = vadd.f32 0.0, %v2234
        %v2236 = vpop.f32.mrb[0].mxu0
        %2237 = vmatprep.mubr.bf16.mxu0 0
        %2238 = vmatmul.mubr.bf16.gmra.mrb[0].mxu0 %v1917
        %v2239 = vpop.f32.mrb[0].mxu0
        %v2240 = vadd.f32 0.0, %v2239
        %v2241 = vpop.f32.mrb[0].mxu0
        %v2242 = vpop.f32.mrb[0].mxu0
        %v2243 = vadd.f32 0.0, %v2242
        %v2244 = vpop.f32.mrb[0].mxu0
        %2245 = vmatprep.mubr.bf16.mxu0 0
        %2246 = vmatmul.mubr.bf16.gmra.mrb[0].mxu0 %v2107
        %v2247 = vpop.f32.mrb[0].mxu0
        %v2248 = vadd.f32 0.0, %v2247
        %v2249 = vpop.f32.mrb[0].mxu0
        %v2250 = vpop.f32.mrb[0].mxu0
        %v2251 = vadd.f32 0.0, %v2250
        %v2252 = vpop.f32.mrb[0].mxu0
        %2253 = vdwg.mxu0
        %v2254 = vadd.f32 %v2064, %v2192
        %v2255 = vadd.f32 %v2065, %v2195
        %v2256 = vadd.f32 %v2066, %v2200
        %v2257 = vadd.f32 %v2067, %v2203
        %v2258 = vadd.f32 %v2068, %v2208
        %v2259 = vadd.f32 %v2069, %v2211
        %v2260 = vadd.f32 %v2070, %v2216
        %v2261 = vadd.f32 %v2071, %v2219
        %v2262 = vadd.f32 %v2072, %v2224
        %v2263 = vadd.f32 %v2073, %v2227
        %v2264 = vadd.f32 %v2074, %v2232
        %v2265 = vadd.f32 %v2075, %v2235
        %v2266 = vadd.f32 %v2076, %v2240
        %v2267 = vadd.f32 %v2077, %v2243
        %v2268 = vadd.f32 %v2078, %v2248
        %v2269 = vadd.f32 %v2079, %v2251
        %v2270 = vld [vmem:[%s2] sm:$0x1]
        %v2272 = vlaneseq
        %v2273 = vshrl.u32 %v2272, 7
        %v2274 = vsub.s32 0, %v2273
        %v2275 = vrot.slane %v2270, %v2274
        %v2277 = vadd.f32 %v2254, %v2275
        %v2278 = vadd.f32 %v2255, %v2275
        %v2279 = vadd.f32 %v2256, %v2275
        %v2280 = vadd.f32 %v2257, %v2275
        %v2281 = vadd.f32 %v2258, %v2275
        %v2282 = vadd.f32 %v2259, %v2275
        %v2283 = vadd.f32 %v2260, %v2275
        %v2284 = vadd.f32 %v2261, %v2275
        %v2285 = vadd.f32 %v2262, %v2275
        %v2286 = vadd.f32 %v2263, %v2275
        %v2287 = vadd.f32 %v2264, %v2275
        %v2288 = vadd.f32 %v2265, %v2275
        %v2289 = vadd.f32 %v2266, %v2275
        %v2290 = vadd.f32 %v2267, %v2275
        %v2291 = vadd.f32 %v2268, %v2275
        %v2292 = vadd.f32 %v2269, %v2275
        %v2293 = vmax.f32 %v2277, 0.0
        %v2294 = vmax.f32 %v2278, 0.0
        %v2295 = vmax.f32 %v2279, 0.0
        %v2296 = vmax.f32 %v2280, 0.0
        %v2297 = vmax.f32 %v2281, 0.0
        %v2298 = vmax.f32 %v2282, 0.0
        %v2299 = vmax.f32 %v2283, 0.0
        %v2300 = vmax.f32 %v2284, 0.0
        %v2301 = vmax.f32 %v2285, 0.0
        %v2302 = vmax.f32 %v2286, 0.0
        %v2303 = vmax.f32 %v2287, 0.0
        %v2304 = vmax.f32 %v2288, 0.0
        %v2305 = vmax.f32 %v2289, 0.0
        %v2306 = vmax.f32 %v2290, 0.0
        %v2307 = vmax.f32 %v2291, 0.0
        %v2308 = vmax.f32 %v2292, 0.0
        %v2309 = vunpack.c.l.bf16 %v820
        %v2310 = vunpack.c.l.bf16 %v830
        %v2311 = vunpack.c.l.bf16 %v844
        %v2312 = vunpack.c.l.bf16 %v854
        %v2313 = vunpack.c.l.bf16 %v868
        %v2314 = vunpack.c.l.bf16 %v878
        %v2315 = vunpack.c.l.bf16 %v892
        %v2316 = vunpack.c.l.bf16 %v902
        %v2317 = vunpack.c.l.bf16 %v916
        %v2318 = vunpack.c.l.bf16 %v926
        %v2319 = vunpack.c.l.bf16 %v940
        %v2320 = vunpack.c.l.bf16 %v950
        %v2321 = vunpack.c.l.bf16 %v964
        %v2322 = vunpack.c.l.bf16 %v974
        %v2323 = vunpack.c.l.bf16 %v1198
        %v2324 = vunpack.c.l.bf16 %v1208
        %v2325 = vadd.f32 %v2293, %v2309
        %v2326 = vadd.f32 %v2294, %v2310
        %v2327 = vadd.f32 %v2295, %v2311
        %v2328 = vadd.f32 %v2296, %v2312
        %v2329 = vadd.f32 %v2297, %v2313
        %v2330 = vadd.f32 %v2298, %v2314
        %v2331 = vadd.f32 %v2299, %v2315
        %v2332 = vadd.f32 %v2300, %v2316
        %v2333 = vadd.f32 %v2301, %v2317
        %v2334 = vadd.f32 %v2302, %v2318
        %v2335 = vadd.f32 %v2303, %v2319
        %v2336 = vadd.f32 %v2304, %v2320
        %v2337 = vadd.f32 %v2305, %v2321
        %v2338 = vadd.f32 %v2306, %v2322
        %v2339 = vadd.f32 %v2307, %v2323
        %v2340 = vadd.f32 %v2308, %v2324
        %2341 = vst [vmem:[%s177] sm:$0xff] %v2325
        %2342 = vst [vmem:[%s177 + $0x8] sm:$0xff] %v2326
        %2343 = vst [vmem:[%s177 + $0x10] sm:$0xff] %v2327
        %2344 = vst [vmem:[%s177 + $0x18] sm:$0xff] %v2328
        %2345 = vst [vmem:[%s177 + $0x20] sm:$0xff] %v2329
        %2346 = vst [vmem:[%s177 + $0x28] sm:$0xff] %v2330
        %2347 = vst [vmem:[%s177 + $0x30] sm:$0xff] %v2331
        %2348 = vst [vmem:[%s177 + $0x38] sm:$0xff] %v2332
        %2349 = vst [vmem:[%s177 + $0x40] sm:$0xff] %v2333
        %2350 = vst [vmem:[%s177 + $0x48] sm:$0xff] %v2334
        %2351 = vst [vmem:[%s177 + $0x50] sm:$0xff] %v2335
        %2352 = vst [vmem:[%s177 + $0x58] sm:$0xff] %v2336
        %2353 = vst [vmem:[%s177 + $0x60] sm:$0xff] %v2337
        %2354 = vst [vmem:[%s177 + $0x68] sm:$0xff] %v2338
        %2355 = vst [vmem:[%s177 + $0x70] sm:$0xff] %v2339
        %2356 = vst [vmem:[%s177 + $0x78] sm:$0xff] %v2340
        %s2357 = sand.u32 %s107, 1
        %s2358 = scalar_lea.sflag [#allocation3], %s2357
        %s2359 = sand.u32 %s107, 1
        %s2360 = smul.addr %s2359, 128
        %s2361 = scalar_lea.vmem [#allocation2], %s2360
        // Predicated region
        $region33: #{tpu_custom_call.1} parent=31 // pred_check
          %p2362 = pneg %p117
        $region34: #{tpu_custom_call.1} parent=31 // pred_check_branch
          %2364 = sbr.rel (%p2362) target = $region36
        $region35: #{tpu_custom_call.1} parent=31 // pred_region
          %s2365 = smul.u32 8, %s22
          %s2367 = ssub.s32 2048, 2048
          %2368 = vsyncadd %s2358, %s2367
          %s2369 = smul.addr %s2365, 2
          %s2370 = smul.addr %s21, 32
          %s2371 = sadd.s32 %s2369, %s2370
          %s2372 = smul.addr %s2371, 128
          %s2373 = scalar_lea.hbm %s3, %s2372
          %s2374 = sshll.u32 %s2361, 4
          %s2375 = int_to_ptr.vmem [resolvable:$true] %s2374
          %2380 = dma.vmem_to_hbm [thread:$0]  %s2375, 2048, %s2373, %s2358, 128, 128, 8
        $region36: #{tpu_custom_call.1} parent=31 // pred_fallthru
          _
      $region32: #{tpu_custom_call.1} parent=5 // pred_fallthru
        _
      %p2381 = scmp.le.s32.totalorder 2, %s12
      // Predicated region
      $region37: #{tpu_custom_call.1} parent=5 // pred_check
        %p2382 = pneg %p2381
      $region38: #{tpu_custom_call.1} parent=5 // pred_check_branch
        %2384 = sbr.rel (%p2382) target = $region40
      $region39: #{tpu_custom_call.1} parent=5 // pred_region
        %s2385 = ssub.s32 %s12, 2
        // Predicated region
        $region41: #{tpu_custom_call.1} parent=39 // pred_check
          %p2386 = pneg %p123
        $region42: #{tpu_custom_call.1} parent=39 // pred_check_branch
          %2388 = sbr.rel (%p2386) target = $region44
        $region43: #{tpu_custom_call.1} parent=39 // pred_region
          %s2389 = sand.u32 %s108, 1
          %s2390 = scalar_lea.sflag [#allocation3], %s2389
          %s2391 = sand.u32 %s108, 1
          %s2392 = smul.addr %s2391, 128
          %s2393 = scalar_lea.vmem [#allocation2], %s2392
          %2394 = dma.done %s2390, 2048
        $region44: #{tpu_custom_call.1} parent=39 // pred_fallthru
          _
      $region40: #{tpu_custom_call.1} parent=5 // pred_fallthru
        _
    $region6: #{tpu_custom_call.1} parent=1 // loop_footer
      %s16 = sadd.s32 1, %s12
    $region7: #{tpu_custom_call.1} parent=1 // loop_footer_branch
      %11 = sbr.rel target = $region3
    $region8: #{tpu_custom_call.1} parent=1 // loop_exit
      _
    %2395 = vsyncpa [#allocation3], 1
    %s2396 = scalar_lea.sflag [#allocation3], 1
    %2397 = vsyncpa %s2396, 1

</llo_original>
